<compile_context>
chip_gen: v5e
topology: v5e:2x2
jax: 0.10.0
libtpu: 0.0.40
codegen_flags: <defaults>
</compile_context>

<pallas_src>
import functools

import jax
import jax.numpy as jnp
import numpy as np
from jax.experimental import pallas as pl
from jax.experimental.pallas import tpu as pltpu


def _pick_batch_block(n, length, target_lanes=512):
    """Samples per grid step.  A block's lane width must be a multiple of 128
    (or cover the whole batch).  Prefer lane-dense blocks (>= target_lanes)
    while keeping >= 2 grid steps so both v7x TensorCores / megacore get work."""
    divisors = [d for d in range(1, n + 1)
                if n % d == 0 and (d == n or (d * length) % 128 == 0)]
    for d in divisors:
        if d * length >= target_lanes and (n // d) >= 2:
            return d
    for d in divisors:
        if d * length >= target_lanes:
            return d
    multi = [d for d in divisors if n // d >= 2]
    return max(multi) if multi else n


def _temporal_block_kernel(x_ref, w1_ref, b1_ref, w2_ref, b2_ref, wd_ref,
                           bd_ref, wqkv_ref, bqkv_ref, wo_ref, bo_ref, o_ref,
                           *, L, K, dilation, H, hd, nb):
    f32, bf16 = jnp.float32, jnp.bfloat16
    E = wo_ref.shape[0]
    NL = x_ref.shape[1]                       # nb * L lanes in this block

    # Lane-local position inside each length-L sample segment (samples are
    # concatenated along the lane axis) -- used for the causal zero fill.
    local = jax.lax.broadcasted_iota(jnp.int32, (1, NL), 1) % L

    def causal_conv(h, w_ref_, b_ref_):
        # h: (C, NL) f32.  Build the dilated causal im2col slab with K masked
        # lane rolls (shift within each sample, zeros before t=0) and contract
        # all K*C taps with one MXU dot (bf16 operands, f32 accumulation).
        taps = []
        for j in range(K):
            shift = (K - 1 - j) * dilation
            if shift == 0:
                taps.append(h)
            else:
                taps.append(jnp.where(local >= shift,
                                      pltpu.roll(h, shift, axis=1), 0.0))
        im2col = jnp.concatenate(taps, axis=0).astype(bf16)    # (K*C, NL)
        return jnp.dot(w_ref_[...], im2col,
                       preferred_element_type=f32) + b_ref_[...]

    x = x_ref[...]                                             # (C_in, NL) f32
    # net: conv1 -> chomp -> relu -> conv2 -> chomp -> relu
    h1 = jnp.maximum(causal_conv(x, w1_ref, b1_ref), 0.0)
    h2 = jnp.maximum(causal_conv(h1, w2_ref, b2_ref), 0.0)
    # TODO(synk): dropout1/dropout2 are identity (inference semantics).

    # residual branch: 1x1 downsample conv
    res = jnp.dot(wd_ref[...], x.astype(bf16),
                  preferred_element_type=f32) + bd_ref[...]    # (E, NL)

    # fused QKV projection over every token of every sample in the block
    qkv = jnp.dot(wqkv_ref[...], h2.astype(bf16),
                  preferred_element_type=f32) + bqkv_ref[...]  # (3E, NL)
    scale = 1.0 / (hd ** 0.5)

    def split_heads(mat):       # (E, L) -> (H, hd, L) without sublane reshape
        return jnp.stack([mat[i * hd:(i + 1) * hd, :] for i in range(H)],
                         axis=0)

    # TODO(synk): for long sequences, tile the (L, L) scores with an online
    # softmax (flash style) to respect v7x's 64 MiB VMEM; L here is tiny.
    ctx_cols = []
    for n in range(nb):         # static per-block sample loop (attention is
        c0 = n * L              # per-sample); heads are the einsum batch dim.
        q3 = split_heads(qkv[0:E, c0:c0 + L] * scale).astype(bf16)
        k3 = split_heads(qkv[E:2 * E, c0:c0 + L]).astype(bf16)
        v3 = split_heads(qkv[2 * E:3 * E, c0:c0 + L]).astype(bf16)
        s = jnp.einsum("hdl,hdm->hlm", q3, k3, preferred_element_type=f32)
        s = s - jnp.max(s, axis=-1, keepdims=True)             # f32 softmax
        p = jnp.exp(s)
        p = p * pl.reciprocal(jnp.sum(p, axis=-1, keepdims=True), approx=True)
        ctx = jnp.einsum("hdm,hlm->hdl", v3, p.astype(bf16),
                         preferred_element_type=f32)           # (H, hd, L)
        ctx_cols.append(jnp.concatenate([ctx[i] for i in range(H)], axis=0))
    ctx_all = jnp.concatenate(ctx_cols, axis=1).astype(bf16)   # (E, NL)

    # fused output projection + residual add + relu; lane-dense (E, NL) store
    out = jnp.dot(wo_ref[...], ctx_all,
                  preferred_element_type=f32) + bo_ref[...]
    o_ref[...] = jnp.maximum(out + res, 0.0).astype(o_ref.dtype)


def temporal_block_forward(x, p, *, dilation, num_heads):
    """x: (N, C_in, L) -> (N, C_out, L).  Matches TemporalBlock.forward (eval)."""
    N, C_in, L = x.shape
    C_out, _, K = p["w1"].shape
    E, H = C_out, num_heads
    assert E % H == 0, "num_heads must divide out_channels"
    hd = E // H

    f32, bf16 = jnp.float32, jnp.bfloat16
    # ---- wrapper-side layout plumbing only (no compute): channel-major with
    # the batch merged into the lane axis so every matmul / store is lane-dense.
    x2d = jnp.transpose(x, (1, 0, 2)).reshape(C_in, N * L).astype(f32)

    # conv weights stacked tap-major for the single im2col dot; bf16 operands
    w1 = jnp.transpose(p["w1"], (0, 2, 1)).reshape(C_out, K * C_in).astype(bf16)
    w2 = jnp.transpose(p["w2"], (0, 2, 1)).reshape(C_out, K * C_out).astype(bf16)
    wd = p["wd"][:, :, 0].astype(bf16)                          # (C_out, C_in)
    wqkv = p["in_w"].astype(bf16)                               # (3E, E)
    wo = p["out_w"].astype(bf16)                                # (E, E)
    b1 = p["b1"].reshape(C_out, 1).astype(f32)
    b2 = p["b2"].reshape(C_out, 1).astype(f32)
    bd = p["bd"].reshape(C_out, 1).astype(f32)
    bqkv = p["in_b"].reshape(3 * E, 1).astype(f32)
    bo = p["out_b"].reshape(E, 1).astype(f32)

    nb = _pick_batch_block(N, L)
    steps = N // nb
    nlb = nb * L

    kern = functools.partial(_temporal_block_kernel, L=L, K=K,
                             dilation=dilation, H=H, hd=hd, nb=nb)

    def _full(a):
        return pl.BlockSpec(a.shape, lambda i: (0, 0))

    flops = (2 * N * L * (C_out * K * C_in + C_out * K * C_out + C_out * C_in
                          + 3 * E * E + E * E)
             + 4 * N * H * hd * L * L)
    bytes_accessed = 4 * (x2d.size + C_out * N * L) + steps * (
        2 * (w1.size + w2.size + wd.size + wqkv.size + wo.size)
        + 4 * (b1.size + b2.size + bd.size + bqkv.size + bo.size))
    cost = pl.CostEstimate(flops=int(flops),
                           transcendentals=int(N * H * L * L),
                           bytes_accessed=int(bytes_accessed))

    # per-step working set (f32 activation slabs + per-sample scores), with
    # headroom for double-buffered I/O; clamped to v7x's smaller 64 MiB VMEM.
    step_bytes = 4 * nlb * (C_in + 8 * C_out) + 4 * nb * H * L * L
    vmem_limit = int(min(64 << 20, max(4 << 20, 4 * step_bytes)))

    y2d = pl.pallas_call(
        kern,
        out_shape=jax.ShapeDtypeStruct((C_out, N * L), f32),
        grid=(steps,),
        in_specs=[
            pl.BlockSpec((C_in, nlb), lambda i: (0, i)),
            _full(w1), _full(b1), _full(w2), _full(b2), _full(wd), _full(bd),
            _full(wqkv), _full(bqkv), _full(wo), _full(bo),
        ],
        out_specs=pl.BlockSpec((C_out, nlb), lambda i: (0, i)),
        compiler_params=pltpu.CompilerParams(
            dimension_semantics=("parallel",),
            vmem_limit_bytes=vmem_limit),
        cost_estimate=cost,
    )(x2d, w1, b1, w2, b2, wd, bd, wqkv, bqkv, wo, bo)

    # (C_out, N*L) -> (N, C_out, L): single tiny XLA transpose on the output.
    return y2d.reshape(C_out, N, L).transpose(1, 0, 2).astype(x.dtype)


# --------------------------------------------------------------------------
# Pure-JAX f32 reference (correctness check only)
# --------------------------------------------------------------------------
def ref_forward(x, p, *, dilation, num_heads):
    def conv(xi, w, b, d, relu):
        K = w.shape[-1]
        pad = (K - 1) * d
        y = jax.lax.conv_general_dilated(
            xi, w, window_strides=(1,), padding=[(pad, pad)],
            rhs_dilation=(d,), dimension_numbers=("NCH", "OIH", "NCH"))
        L = xi.shape[-1]
        y = y[:, :, :L] + b[None, :, None]
        return jnp.maximum(y, 0.0) if relu else y

    h = conv(x, p["w1"], p["b1"], dilation, True)
    h = conv(h, p["w2"], p["b2"], dilation, True)
    res = conv(x, p["wd"], p["bd"], 1, False)

    N, E, L = h.shape
    H = num_heads
    hd = E // H
    xa = jnp.transpose(h, (0, 2, 1))                              # (N, L, E)
    Wq, Wk, Wv = jnp.split(p["in_w"], 3, axis=0)
    bq, bk, bv = jnp.split(p["in_b"], 3, axis=0)
    q = (xa @ Wq.T + bq).reshape(N, L, H, hd)
    k = (xa @ Wk.T + bk).reshape(N, L, H, hd)
    v = (xa @ Wv.T + bv).reshape(N, L, H, hd)
    s = jnp.einsum("nlhd,nmhd->nhlm", q, k) / jnp.sqrt(jnp.float32(hd))
    a = jax.nn.softmax(s, axis=-1)
    ctx = jnp.einsum("nhlm,nmhd->nlhd", a, v).reshape(N, L, E)
    out = ctx @ p["out_w"].T + p["out_b"]
    out = jnp.transpose(out, (0, 2, 1))                           # (N, E, L)
    return jnp.maximum(out + res, 0.0)


# --------------------------------------------------------------------------
if __name__ == "__main__":
    # Small shapes consistent with the module (Conv1d inputs are (N, C, L)).
    N, C_in, C_out, L = 2, 4, 8, 16
    K, dilation, num_heads = 3, 2, 4          # padding = (K-1)*dilation (causal)

    keys = jax.random.split(jax.random.PRNGKey(0), 11)
    s = 0.1
    params = {
        "w1": s * jax.random.normal(keys[0], (C_out, C_in, K), jnp.float32),
        "b1": s * jax.random.normal(keys[1], (C_out,), jnp.float32),
        "w2": s * jax.random.normal(keys[2], (C_out, C_out, K), jnp.float32),
        "b2": s * jax.random.normal(keys[3], (C_out,), jnp.float32),
        "wd": s * jax.random.normal(keys[4], (C_out, C_in, 1), jnp.float32),
        "bd": s * jax.random.normal(keys[5], (C_out,), jnp.float32),
        "in_w": s * jax.random.normal(keys[6], (3 * C_out, C_out), jnp.float32),
        "in_b": s * jax.random.normal(keys[7], (3 * C_out,), jnp.float32),
        "out_w": s * jax.random.normal(keys[8], (C_out, C_out), jnp.float32),
        "out_b": s * jax.random.normal(keys[9], (C_out,), jnp.float32),
    }
    x = jax.random.normal(keys[10], (N, C_in, L), jnp.float32)

    y = jax.block_until_ready(
        temporal_block_forward(x, params, dilation=dilation,
                               num_heads=num_heads))

    y_ref = ref_forward(x, params, dilation=dilation, num_heads=num_heads)
    # Kernel uses bf16 matmul operands (f32 accumulation) + EUP approx
    # reciprocal, so compare against the pure-f32 reference at bf16 tolerance.
    np.testing.assert_allclose(np.asarray(y), np.asarray(y_ref),
                               rtol=2e-2, atol=2e-2)
    print("KERNEL_OK")
</pallas_src>

<mosaic_0001>
module attributes {stable_mosaic.version = 11 : i64} {
  func.func @_temporal_block_kernel(%arg0: i32, %arg1: memref<4x32xf32, #tpu.memory_space<vmem>>, %arg2: memref<8x12xbf16, #tpu.memory_space<vmem>>, %arg3: memref<8x1xf32, #tpu.memory_space<vmem>>, %arg4: memref<8x24xbf16, #tpu.memory_space<vmem>>, %arg5: memref<8x1xf32, #tpu.memory_space<vmem>>, %arg6: memref<8x4xbf16, #tpu.memory_space<vmem>>, %arg7: memref<8x1xf32, #tpu.memory_space<vmem>>, %arg8: memref<24x8xbf16, #tpu.memory_space<vmem>>, %arg9: memref<24x1xf32, #tpu.memory_space<vmem>>, %arg10: memref<8x8xbf16, #tpu.memory_space<vmem>>, %arg11: memref<8x1xf32, #tpu.memory_space<vmem>>, %arg12: memref<8x32xf32, #tpu.memory_space<vmem>>) attributes {dimension_semantics = [#tpu.dimension_semantics<parallel>], iteration_bounds = array<i64: 1>, scalar_prefetch = 0 : i64, scratch_operands = 0 : i64, tpu.core_type = #tpu.core_type<tc>, window_params = [{transform_indices = @transform_0, window_bounds = array<i64: 4, 32>}, {pipeline_mode = #tpu.pipeline_mode<synchronous>, transform_indices = @transform_1, window_bounds = array<i64: 8, 12>}, {pipeline_mode = #tpu.pipeline_mode<synchronous>, transform_indices = @transform_2, window_bounds = array<i64: 8, 1>}, {pipeline_mode = #tpu.pipeline_mode<synchronous>, transform_indices = @transform_3, window_bounds = array<i64: 8, 24>}, {pipeline_mode = #tpu.pipeline_mode<synchronous>, transform_indices = @transform_4, window_bounds = array<i64: 8, 1>}, {pipeline_mode = #tpu.pipeline_mode<synchronous>, transform_indices = @transform_5, window_bounds = array<i64: 8, 4>}, {pipeline_mode = #tpu.pipeline_mode<synchronous>, transform_indices = @transform_6, window_bounds = array<i64: 8, 1>}, {pipeline_mode = #tpu.pipeline_mode<synchronous>, transform_indices = @transform_7, window_bounds = array<i64: 24, 8>}, {pipeline_mode = #tpu.pipeline_mode<synchronous>, transform_indices = @transform_8, window_bounds = array<i64: 24, 1>}, {pipeline_mode = #tpu.pipeline_mode<synchronous>, transform_indices = @transform_9, window_bounds = array<i64: 8, 8>}, {pipeline_mode = #tpu.pipeline_mode<synchronous>, transform_indices = @transform_10, window_bounds = array<i64: 8, 1>}, {transform_indices = @transform_11, window_bounds = array<i64: 8, 32>}]} {
    %0 = tpu.iota {dimensions = array<i32: 1>} : vector<1x32xi32>
    %c16_i32 = arith.constant 16 : i32
    %c0_i32 = arith.constant 0 : i32
    %1 = arith.cmpi eq, %c16_i32, %c0_i32 : i32
    %c1_i32 = arith.constant 1 : i32
    %2 = arith.select %1, %c1_i32, %c16_i32 : i32
    %3 = vector.broadcast %2 : i32 to vector<1x32xi32>
    %4 = arith.remsi %0, %3 : vector<1x32xi32>
    %c0_i32_0 = arith.constant 0 : i32
    %5 = vector.broadcast %c0_i32_0 : i32 to vector<1x32xi32>
    %6 = arith.cmpi ne, %4, %5 : vector<1x32xi32>
    %c0_i32_1 = arith.constant 0 : i32
    %7 = vector.broadcast %c0_i32_1 : i32 to vector<1x32xi32>
    %8 = arith.cmpi slt, %4, %7 : vector<1x32xi32>
    %c0_i32_2 = arith.constant 0 : i32
    %9 = arith.cmpi slt, %2, %c0_i32_2 : i32
    %10 = vector.broadcast %9 : i1 to vector<1x32xi1>
    %11 = vector.broadcast %10 : vector<1x32xi1> to vector<1x32xi1>
    %12 = arith.xori %8, %11 : vector<1x32xi1>
    %13 = arith.andi %12, %6 : vector<1x32xi1>
    %14 = vector.broadcast %2 : i32 to vector<1x32xi32>
    %15 = arith.addi %4, %14 : vector<1x32xi32>
    %16 = arith.select %13, %15, %4 : vector<1x32xi1>, vector<1x32xi32>
    %c0 = arith.constant 0 : index
    %c0_3 = arith.constant 0 : index
    %17 = vector.load %arg1[%c0, %c0_3] : memref<4x32xf32, #tpu.memory_space<vmem>>, vector<4x32xf32>
    %c4_i32 = arith.constant 4 : i32
    %18 = vector.broadcast %c4_i32 : i32 to vector<1x32xi32>
    %19 = arith.cmpi sge, %16, %18 : vector<1x32xi32>
    %c4_i32_4 = arith.constant 4 : i32
    %20 = tpu.dynamic_rotate %17 by %c4_i32_4 dim 1 : vector<4x32xf32>, i32 -> vector<4x32xf32>
    %cst = arith.constant 0.000000e+00 : f32
    %21 = vector.shape_cast %19 : vector<1x32xi1> to vector<1x32xi1>
    %22 = vector.broadcast %21 : vector<1x32xi1> to vector<4x32xi1>
    %23 = vector.broadcast %cst : f32 to vector<4x32xf32>
    %24 = arith.select %22, %20, %23 : vector<4x32xi1>, vector<4x32xf32>
    %c2_i32 = arith.constant 2 : i32
    %25 = vector.broadcast %c2_i32 : i32 to vector<1x32xi32>
    %26 = arith.cmpi sge, %16, %25 : vector<1x32xi32>
    %c2_i32_5 = arith.constant 2 : i32
    %27 = tpu.dynamic_rotate %17 by %c2_i32_5 dim 1 : vector<4x32xf32>, i32 -> vector<4x32xf32>
    %cst_6 = arith.constant 0.000000e+00 : f32
    %28 = vector.shape_cast %26 : vector<1x32xi1> to vector<1x32xi1>
    %29 = vector.broadcast %28 : vector<1x32xi1> to vector<4x32xi1>
    %30 = vector.broadcast %cst_6 : f32 to vector<4x32xf32>
    %31 = arith.select %29, %27, %30 : vector<4x32xi1>, vector<4x32xf32>
    %32 = tpu.concatenate %24, %31, %17 in 0 : vector<4x32xf32>, vector<4x32xf32>, vector<4x32xf32> -> vector<12x32xf32>
    %33 = arith.truncf %32 : vector<12x32xf32> to vector<12x32xbf16>
    %c0_7 = arith.constant 0 : index
    %c0_8 = arith.constant 0 : index
    %34 = vector.load %arg2[%c0_7, %c0_8] : memref<8x12xbf16, #tpu.memory_space<vmem>>, vector<8x12xbf16>
    %cst_9 = arith.constant dense<0.000000e+00> : vector<8x32xf32>
    %35 = tpu.matmul %34, %33, %cst_9 {dimension_numbers = #tpu.dot_dimension_numbers<[1], [0], [0], [1], [0, 0, 1, 1], [], []>} : vector<8x12xbf16>, vector<12x32xbf16>, vector<8x32xf32> -> vector<8x32xf32>
    %c0_10 = arith.constant 0 : index
    %c0_11 = arith.constant 0 : index
    %36 = vector.load %arg3[%c0_10, %c0_11] : memref<8x1xf32, #tpu.memory_space<vmem>>, vector<8x1xf32>
    %37 = vector.broadcast %36 : vector<8x1xf32> to vector<8x32xf32>
    %38 = arith.addf %35, %37 : vector<8x32xf32>
    %cst_12 = arith.constant 0.000000e+00 : f32
    %39 = vector.broadcast %cst_12 : f32 to vector<8x32xf32>
    %40 = arith.maximumf %38, %39 : vector<8x32xf32>
    %c4_i32_13 = arith.constant 4 : i32
    %41 = vector.broadcast %c4_i32_13 : i32 to vector<1x32xi32>
    %42 = arith.cmpi sge, %16, %41 : vector<1x32xi32>
    %c4_i32_14 = arith.constant 4 : i32
    %43 = tpu.dynamic_rotate %40 by %c4_i32_14 dim 1 : vector<8x32xf32>, i32 -> vector<8x32xf32>
    %cst_15 = arith.constant 0.000000e+00 : f32
    %44 = vector.shape_cast %42 : vector<1x32xi1> to vector<1x32xi1>
    %45 = vector.broadcast %44 : vector<1x32xi1> to vector<8x32xi1>
    %46 = vector.broadcast %cst_15 : f32 to vector<8x32xf32>
    %47 = arith.select %45, %43, %46 : vector<8x32xi1>, vector<8x32xf32>
    %c2_i32_16 = arith.constant 2 : i32
    %48 = vector.broadcast %c2_i32_16 : i32 to vector<1x32xi32>
    %49 = arith.cmpi sge, %16, %48 : vector<1x32xi32>
    %c2_i32_17 = arith.constant 2 : i32
    %50 = tpu.dynamic_rotate %40 by %c2_i32_17 dim 1 : vector<8x32xf32>, i32 -> vector<8x32xf32>
    %cst_18 = arith.constant 0.000000e+00 : f32
    %51 = vector.shape_cast %49 : vector<1x32xi1> to vector<1x32xi1>
    %52 = vector.broadcast %51 : vector<1x32xi1> to vector<8x32xi1>
    %53 = vector.broadcast %cst_18 : f32 to vector<8x32xf32>
    %54 = arith.select %52, %50, %53 : vector<8x32xi1>, vector<8x32xf32>
    %55 = tpu.concatenate %47, %54, %40 in 0 : vector<8x32xf32>, vector<8x32xf32>, vector<8x32xf32> -> vector<24x32xf32>
    %56 = arith.truncf %55 : vector<24x32xf32> to vector<24x32xbf16>
    %c0_19 = arith.constant 0 : index
    %c0_20 = arith.constant 0 : index
    %57 = vector.load %arg4[%c0_19, %c0_20] : memref<8x24xbf16, #tpu.memory_space<vmem>>, vector<8x24xbf16>
    %cst_21 = arith.constant dense<0.000000e+00> : vector<8x32xf32>
    %58 = tpu.matmul %57, %56, %cst_21 {dimension_numbers = #tpu.dot_dimension_numbers<[1], [0], [0], [1], [0, 0, 1, 1], [], []>} : vector<8x24xbf16>, vector<24x32xbf16>, vector<8x32xf32> -> vector<8x32xf32>
    %c0_22 = arith.constant 0 : index
    %c0_23 = arith.constant 0 : index
    %59 = vector.load %arg5[%c0_22, %c0_23] : memref<8x1xf32, #tpu.memory_space<vmem>>, vector<8x1xf32>
    %60 = vector.broadcast %59 : vector<8x1xf32> to vector<8x32xf32>
    %61 = arith.addf %58, %60 : vector<8x32xf32>
    %cst_24 = arith.constant 0.000000e+00 : f32
    %62 = vector.broadcast %cst_24 : f32 to vector<8x32xf32>
    %63 = arith.maximumf %61, %62 : vector<8x32xf32>
    %c0_25 = arith.constant 0 : index
    %c0_26 = arith.constant 0 : index
    %64 = vector.load %arg6[%c0_25, %c0_26] : memref<8x4xbf16, #tpu.memory_space<vmem>>, vector<8x4xbf16>
    %65 = arith.truncf %17 : vector<4x32xf32> to vector<4x32xbf16>
    %cst_27 = arith.constant dense<0.000000e+00> : vector<8x32xf32>
    %66 = tpu.matmul %64, %65, %cst_27 {dimension_numbers = #tpu.dot_dimension_numbers<[1], [0], [0], [1], [0, 0, 1, 1], [], []>} : vector<8x4xbf16>, vector<4x32xbf16>, vector<8x32xf32> -> vector<8x32xf32>
    %c0_28 = arith.constant 0 : index
    %c0_29 = arith.constant 0 : index
    %67 = vector.load %arg7[%c0_28, %c0_29] : memref<8x1xf32, #tpu.memory_space<vmem>>, vector<8x1xf32>
    %68 = vector.broadcast %67 : vector<8x1xf32> to vector<8x32xf32>
    %69 = arith.addf %66, %68 : vector<8x32xf32>
    %c0_30 = arith.constant 0 : index
    %c0_31 = arith.constant 0 : index
    %70 = vector.load %arg8[%c0_30, %c0_31] : memref<24x8xbf16, #tpu.memory_space<vmem>>, vector<24x8xbf16>
    %71 = arith.truncf %63 : vector<8x32xf32> to vector<8x32xbf16>
    %cst_32 = arith.constant dense<0.000000e+00> : vector<24x32xf32>
    %72 = tpu.matmul %70, %71, %cst_32 {dimension_numbers = #tpu.dot_dimension_numbers<[1], [0], [0], [1], [0, 0, 1, 1], [], []>} : vector<24x8xbf16>, vector<8x32xbf16>, vector<24x32xf32> -> vector<24x32xf32>
    %c0_33 = arith.constant 0 : index
    %c0_34 = arith.constant 0 : index
    %73 = vector.load %arg9[%c0_33, %c0_34] : memref<24x1xf32, #tpu.memory_space<vmem>>, vector<24x1xf32>
    %74 = vector.broadcast %73 : vector<24x1xf32> to vector<24x32xf32>
    %75 = arith.addf %72, %74 : vector<24x32xf32>
    %76 = vector.extract_strided_slice %75 {offsets = [0, 0], sizes = [8, 16], strides = [1, 1]} : vector<24x32xf32> to vector<8x16xf32>
    %cst_35 = arith.constant 0.707106769 : f32
    %77 = vector.broadcast %cst_35 : f32 to vector<8x16xf32>
    %78 = arith.mulf %76, %77 : vector<8x16xf32>
    %79 = vector.extract_strided_slice %78 {offsets = [0, 0], sizes = [2, 16], strides = [1, 1]} : vector<8x16xf32> to vector<2x16xf32>
    %80 = vector.extract_strided_slice %78 {offsets = [2, 0], sizes = [2, 16], strides = [1, 1]} : vector<8x16xf32> to vector<2x16xf32>
    %81 = vector.extract_strided_slice %78 {offsets = [4, 0], sizes = [2, 16], strides = [1, 1]} : vector<8x16xf32> to vector<2x16xf32>
    %82 = vector.extract_strided_slice %78 {offsets = [6, 0], sizes = [2, 16], strides = [1, 1]} : vector<8x16xf32> to vector<2x16xf32>
    %83 = vector.shape_cast %79 : vector<2x16xf32> to vector<1x2x16xf32>
    %84 = vector.shape_cast %80 : vector<2x16xf32> to vector<1x2x16xf32>
    %85 = vector.shape_cast %81 : vector<2x16xf32> to vector<1x2x16xf32>
    %86 = vector.shape_cast %82 : vector<2x16xf32> to vector<1x2x16xf32>
    %87 = tpu.concatenate %83, %84, %85, %86 in 0 : vector<1x2x16xf32>, vector<1x2x16xf32>, vector<1x2x16xf32>, vector<1x2x16xf32> -> vector<4x2x16xf32>
    %88 = arith.truncf %87 : vector<4x2x16xf32> to vector<4x2x16xbf16>
    %89 = vector.extract_strided_slice %75 {offsets = [8, 0], sizes = [8, 16], strides = [1, 1]} : vector<24x32xf32> to vector<8x16xf32>
    %90 = vector.extract_strided_slice %89 {offsets = [0, 0], sizes = [2, 16], strides = [1, 1]} : vector<8x16xf32> to vector<2x16xf32>
    %91 = vector.extract_strided_slice %89 {offsets = [2, 0], sizes = [2, 16], strides = [1, 1]} : vector<8x16xf32> to vector<2x16xf32>
    %92 = vector.extract_strided_slice %89 {offsets = [4, 0], sizes = [2, 16], strides = [1, 1]} : vector<8x16xf32> to vector<2x16xf32>
    %93 = vector.extract_strided_slice %89 {offsets = [6, 0], sizes = [2, 16], strides = [1, 1]} : vector<8x16xf32> to vector<2x16xf32>
    %94 = vector.shape_cast %90 : vector<2x16xf32> to vector<1x2x16xf32>
    %95 = vector.shape_cast %91 : vector<2x16xf32> to vector<1x2x16xf32>
    %96 = vector.shape_cast %92 : vector<2x16xf32> to vector<1x2x16xf32>
    %97 = vector.shape_cast %93 : vector<2x16xf32> to vector<1x2x16xf32>
    %98 = tpu.concatenate %94, %95, %96, %97 in 0 : vector<1x2x16xf32>, vector<1x2x16xf32>, vector<1x2x16xf32>, vector<1x2x16xf32> -> vector<4x2x16xf32>
    %99 = arith.truncf %98 : vector<4x2x16xf32> to vector<4x2x16xbf16>
    %100 = vector.extract_strided_slice %75 {offsets = [16, 0], sizes = [8, 16], strides = [1, 1]} : vector<24x32xf32> to vector<8x16xf32>
    %101 = vector.extract_strided_slice %100 {offsets = [0, 0], sizes = [2, 16], strides = [1, 1]} : vector<8x16xf32> to vector<2x16xf32>
    %102 = vector.extract_strided_slice %100 {offsets = [2, 0], sizes = [2, 16], strides = [1, 1]} : vector<8x16xf32> to vector<2x16xf32>
    %103 = vector.extract_strided_slice %100 {offsets = [4, 0], sizes = [2, 16], strides = [1, 1]} : vector<8x16xf32> to vector<2x16xf32>
    %104 = vector.extract_strided_slice %100 {offsets = [6, 0], sizes = [2, 16], strides = [1, 1]} : vector<8x16xf32> to vector<2x16xf32>
    %105 = vector.shape_cast %101 : vector<2x16xf32> to vector<1x2x16xf32>
    %106 = vector.shape_cast %102 : vector<2x16xf32> to vector<1x2x16xf32>
    %107 = vector.shape_cast %103 : vector<2x16xf32> to vector<1x2x16xf32>
    %108 = vector.shape_cast %104 : vector<2x16xf32> to vector<1x2x16xf32>
    %109 = tpu.concatenate %105, %106, %107, %108 in 0 : vector<1x2x16xf32>, vector<1x2x16xf32>, vector<1x2x16xf32>, vector<1x2x16xf32> -> vector<4x2x16xf32>
    %110 = arith.truncf %109 : vector<4x2x16xf32> to vector<4x2x16xbf16>
    "tpu.trace_start"() <{level = 10 : i32, message = "hdl,hdm->hlm"}> : () -> ()
    %cst_36 = arith.constant dense<0.000000e+00> : vector<4x16x16xf32>
    %111 = tpu.matmul %88, %99, %cst_36 {dimension_numbers = #tpu.dot_dimension_numbers<[1], [1], [2], [2], [0, 0, 0, 2, 1, 2], [0], [0]>} : vector<4x2x16xbf16>, vector<4x2x16xbf16>, vector<4x16x16xf32> -> vector<4x16x16xf32>
    "tpu.trace_stop"() : () -> ()
    %cst_37 = arith.constant dense<0xFF800000> : vector<4x16xf32>
    %112 = vector.multi_reduction <maximumf>, %111, %cst_37 [2] : vector<4x16x16xf32> to vector<4x16xf32>
    %113 = vector.shape_cast %112 : vector<4x16xf32> to vector<4x16x1xf32>
    %114 = vector.broadcast %113 : vector<4x16x1xf32> to vector<4x16x16xf32>
    %115 = arith.subf %111, %114 : vector<4x16x16xf32>
    %116 = math.exp %115 : vector<4x16x16xf32>
    %cst_38 = arith.constant dense<0.000000e+00> : vector<4x16xf32>
    %117 = vector.multi_reduction <add>, %116, %cst_38 [2] : vector<4x16x16xf32> to vector<4x16xf32>
    %118 = vector.shape_cast %117 : vector<4x16xf32> to vector<4x16x1xf32>
    %119 = tpu.reciprocal %118 {approx = true} : vector<4x16x1xf32> -> vector<4x16x1xf32>
    %120 = vector.broadcast %119 : vector<4x16x1xf32> to vector<4x16x16xf32>
    %121 = arith.mulf %116, %120 : vector<4x16x16xf32>
    %122 = arith.truncf %121 : vector<4x16x16xf32> to vector<4x16x16xbf16>
    "tpu.trace_start"() <{level = 10 : i32, message = "hdm,hlm->hdl"}> : () -> ()
    %cst_39 = arith.constant dense<0.000000e+00> : vector<4x2x16xf32>
    %123 = tpu.matmul %110, %122, %cst_39 {dimension_numbers = #tpu.dot_dimension_numbers<[2], [2], [1], [1], [0, 0, 0, 1, 1, 1], [0], [0]>} : vector<4x2x16xbf16>, vector<4x16x16xbf16>, vector<4x2x16xf32> -> vector<4x2x16xf32>
    "tpu.trace_stop"() : () -> ()
    %124 = vector.extract_strided_slice %123 {offsets = [0, 0, 0], sizes = [1, 2, 16], strides = [1, 1, 1]} : vector<4x2x16xf32> to vector<1x2x16xf32>
    %125 = vector.shape_cast %124 : vector<1x2x16xf32> to vector<2x16xf32>
    %126 = vector.extract_strided_slice %123 {offsets = [1, 0, 0], sizes = [1, 2, 16], strides = [1, 1, 1]} : vector<4x2x16xf32> to vector<1x2x16xf32>
    %127 = vector.shape_cast %126 : vector<1x2x16xf32> to vector<2x16xf32>
    %128 = vector.extract_strided_slice %123 {offsets = [2, 0, 0], sizes = [1, 2, 16], strides = [1, 1, 1]} : vector<4x2x16xf32> to vector<1x2x16xf32>
    %129 = vector.shape_cast %128 : vector<1x2x16xf32> to vector<2x16xf32>
    %130 = vector.extract_strided_slice %123 {offsets = [3, 0, 0], sizes = [1, 2, 16], strides = [1, 1, 1]} : vector<4x2x16xf32> to vector<1x2x16xf32>
    %131 = vector.shape_cast %130 : vector<1x2x16xf32> to vector<2x16xf32>
    %132 = tpu.concatenate %125, %127, %129, %131 in 0 : vector<2x16xf32>, vector<2x16xf32>, vector<2x16xf32>, vector<2x16xf32> -> vector<8x16xf32>
    %133 = vector.extract_strided_slice %75 {offsets = [0, 16], sizes = [8, 16], strides = [1, 1]} : vector<24x32xf32> to vector<8x16xf32>
    %cst_40 = arith.constant 0.707106769 : f32
    %134 = vector.broadcast %cst_40 : f32 to vector<8x16xf32>
    %135 = arith.mulf %133, %134 : vector<8x16xf32>
    %136 = vector.extract_strided_slice %135 {offsets = [0, 0], sizes = [2, 16], strides = [1, 1]} : vector<8x16xf32> to vector<2x16xf32>
    %137 = vector.extract_strided_slice %135 {offsets = [2, 0], sizes = [2, 16], strides = [1, 1]} : vector<8x16xf32> to vector<2x16xf32>
    %138 = vector.extract_strided_slice %135 {offsets = [4, 0], sizes = [2, 16], strides = [1, 1]} : vector<8x16xf32> to vector<2x16xf32>
    %139 = vector.extract_strided_slice %135 {offsets = [6, 0], sizes = [2, 16], strides = [1, 1]} : vector<8x16xf32> to vector<2x16xf32>
    %140 = vector.shape_cast %136 : vector<2x16xf32> to vector<1x2x16xf32>
    %141 = vector.shape_cast %137 : vector<2x16xf32> to vector<1x2x16xf32>
    %142 = vector.shape_cast %138 : vector<2x16xf32> to vector<1x2x16xf32>
    %143 = vector.shape_cast %139 : vector<2x16xf32> to vector<1x2x16xf32>
    %144 = tpu.concatenate %140, %141, %142, %143 in 0 : vector<1x2x16xf32>, vector<1x2x16xf32>, vector<1x2x16xf32>, vector<1x2x16xf32> -> vector<4x2x16xf32>
    %145 = arith.truncf %144 : vector<4x2x16xf32> to vector<4x2x16xbf16>
    %146 = vector.extract_strided_slice %75 {offsets = [8, 16], sizes = [8, 16], strides = [1, 1]} : vector<24x32xf32> to vector<8x16xf32>
    %147 = vector.extract_strided_slice %146 {offsets = [0, 0], sizes = [2, 16], strides = [1, 1]} : vector<8x16xf32> to vector<2x16xf32>
    %148 = vector.extract_strided_slice %146 {offsets = [2, 0], sizes = [2, 16], strides = [1, 1]} : vector<8x16xf32> to vector<2x16xf32>
    %149 = vector.extract_strided_slice %146 {offsets = [4, 0], sizes = [2, 16], strides = [1, 1]} : vector<8x16xf32> to vector<2x16xf32>
    %150 = vector.extract_strided_slice %146 {offsets = [6, 0], sizes = [2, 16], strides = [1, 1]} : vector<8x16xf32> to vector<2x16xf32>
    %151 = vector.shape_cast %147 : vector<2x16xf32> to vector<1x2x16xf32>
    %152 = vector.shape_cast %148 : vector<2x16xf32> to vector<1x2x16xf32>
    %153 = vector.shape_cast %149 : vector<2x16xf32> to vector<1x2x16xf32>
    %154 = vector.shape_cast %150 : vector<2x16xf32> to vector<1x2x16xf32>
    %155 = tpu.concatenate %151, %152, %153, %154 in 0 : vector<1x2x16xf32>, vector<1x2x16xf32>, vector<1x2x16xf32>, vector<1x2x16xf32> -> vector<4x2x16xf32>
    %156 = arith.truncf %155 : vector<4x2x16xf32> to vector<4x2x16xbf16>
    %157 = vector.extract_strided_slice %75 {offsets = [16, 16], sizes = [8, 16], strides = [1, 1]} : vector<24x32xf32> to vector<8x16xf32>
    %158 = vector.extract_strided_slice %157 {offsets = [0, 0], sizes = [2, 16], strides = [1, 1]} : vector<8x16xf32> to vector<2x16xf32>
    %159 = vector.extract_strided_slice %157 {offsets = [2, 0], sizes = [2, 16], strides = [1, 1]} : vector<8x16xf32> to vector<2x16xf32>
    %160 = vector.extract_strided_slice %157 {offsets = [4, 0], sizes = [2, 16], strides = [1, 1]} : vector<8x16xf32> to vector<2x16xf32>
    %161 = vector.extract_strided_slice %157 {offsets = [6, 0], sizes = [2, 16], strides = [1, 1]} : vector<8x16xf32> to vector<2x16xf32>
    %162 = vector.shape_cast %158 : vector<2x16xf32> to vector<1x2x16xf32>
    %163 = vector.shape_cast %159 : vector<2x16xf32> to vector<1x2x16xf32>
    %164 = vector.shape_cast %160 : vector<2x16xf32> to vector<1x2x16xf32>
    %165 = vector.shape_cast %161 : vector<2x16xf32> to vector<1x2x16xf32>
    %166 = tpu.concatenate %162, %163, %164, %165 in 0 : vector<1x2x16xf32>, vector<1x2x16xf32>, vector<1x2x16xf32>, vector<1x2x16xf32> -> vector<4x2x16xf32>
    %167 = arith.truncf %166 : vector<4x2x16xf32> to vector<4x2x16xbf16>
    "tpu.trace_start"() <{level = 10 : i32, message = "hdl,hdm->hlm"}> : () -> ()
    %cst_41 = arith.constant dense<0.000000e+00> : vector<4x16x16xf32>
    %168 = tpu.matmul %145, %156, %cst_41 {dimension_numbers = #tpu.dot_dimension_numbers<[1], [1], [2], [2], [0, 0, 0, 2, 1, 2], [0], [0]>} : vector<4x2x16xbf16>, vector<4x2x16xbf16>, vector<4x16x16xf32> -> vector<4x16x16xf32>
    "tpu.trace_stop"() : () -> ()
    %cst_42 = arith.constant dense<0xFF800000> : vector<4x16xf32>
    %169 = vector.multi_reduction <maximumf>, %168, %cst_42 [2] : vector<4x16x16xf32> to vector<4x16xf32>
    %170 = vector.shape_cast %169 : vector<4x16xf32> to vector<4x16x1xf32>
    %171 = vector.broadcast %170 : vector<4x16x1xf32> to vector<4x16x16xf32>
    %172 = arith.subf %168, %171 : vector<4x16x16xf32>
    %173 = math.exp %172 : vector<4x16x16xf32>
    %cst_43 = arith.constant dense<0.000000e+00> : vector<4x16xf32>
    %174 = vector.multi_reduction <add>, %173, %cst_43 [2] : vector<4x16x16xf32> to vector<4x16xf32>
    %175 = vector.shape_cast %174 : vector<4x16xf32> to vector<4x16x1xf32>
    %176 = tpu.reciprocal %175 {approx = true} : vector<4x16x1xf32> -> vector<4x16x1xf32>
    %177 = vector.broadcast %176 : vector<4x16x1xf32> to vector<4x16x16xf32>
    %178 = arith.mulf %173, %177 : vector<4x16x16xf32>
    %179 = arith.truncf %178 : vector<4x16x16xf32> to vector<4x16x16xbf16>
    "tpu.trace_start"() <{level = 10 : i32, message = "hdm,hlm->hdl"}> : () -> ()
    %cst_44 = arith.constant dense<0.000000e+00> : vector<4x2x16xf32>
    %180 = tpu.matmul %167, %179, %cst_44 {dimension_numbers = #tpu.dot_dimension_numbers<[2], [2], [1], [1], [0, 0, 0, 1, 1, 1], [0], [0]>} : vector<4x2x16xbf16>, vector<4x16x16xbf16>, vector<4x2x16xf32> -> vector<4x2x16xf32>
    "tpu.trace_stop"() : () -> ()
    %181 = vector.extract_strided_slice %180 {offsets = [0, 0, 0], sizes = [1, 2, 16], strides = [1, 1, 1]} : vector<4x2x16xf32> to vector<1x2x16xf32>
    %182 = vector.shape_cast %181 : vector<1x2x16xf32> to vector<2x16xf32>
    %183 = vector.extract_strided_slice %180 {offsets = [1, 0, 0], sizes = [1, 2, 16], strides = [1, 1, 1]} : vector<4x2x16xf32> to vector<1x2x16xf32>
    %184 = vector.shape_cast %183 : vector<1x2x16xf32> to vector<2x16xf32>
    %185 = vector.extract_strided_slice %180 {offsets = [2, 0, 0], sizes = [1, 2, 16], strides = [1, 1, 1]} : vector<4x2x16xf32> to vector<1x2x16xf32>
    %186 = vector.shape_cast %185 : vector<1x2x16xf32> to vector<2x16xf32>
    %187 = vector.extract_strided_slice %180 {offsets = [3, 0, 0], sizes = [1, 2, 16], strides = [1, 1, 1]} : vector<4x2x16xf32> to vector<1x2x16xf32>
    %188 = vector.shape_cast %187 : vector<1x2x16xf32> to vector<2x16xf32>
    %189 = tpu.concatenate %182, %184, %186, %188 in 0 : vector<2x16xf32>, vector<2x16xf32>, vector<2x16xf32>, vector<2x16xf32> -> vector<8x16xf32>
    %190 = tpu.concatenate %132, %189 in 1 : vector<8x16xf32>, vector<8x16xf32> -> vector<8x32xf32>
    %191 = arith.truncf %190 : vector<8x32xf32> to vector<8x32xbf16>
    %c0_45 = arith.constant 0 : index
    %c0_46 = arith.constant 0 : index
    %192 = vector.load %arg10[%c0_45, %c0_46] : memref<8x8xbf16, #tpu.memory_space<vmem>>, vector<8x8xbf16>
    %cst_47 = arith.constant dense<0.000000e+00> : vector<8x32xf32>
    %193 = tpu.matmul %192, %191, %cst_47 {dimension_numbers = #tpu.dot_dimension_numbers<[1], [0], [0], [1], [0, 0, 1, 1], [], []>} : vector<8x8xbf16>, vector<8x32xbf16>, vector<8x32xf32> -> vector<8x32xf32>
    %c0_48 = arith.constant 0 : index
    %c0_49 = arith.constant 0 : index
    %194 = vector.load %arg11[%c0_48, %c0_49] : memref<8x1xf32, #tpu.memory_space<vmem>>, vector<8x1xf32>
    %195 = vector.broadcast %194 : vector<8x1xf32> to vector<8x32xf32>
    %196 = arith.addf %193, %195 : vector<8x32xf32>
    %197 = arith.addf %196, %69 : vector<8x32xf32>
    %cst_50 = arith.constant 0.000000e+00 : f32
    %198 = vector.broadcast %cst_50 : f32 to vector<8x32xf32>
    %199 = arith.maximumf %197, %198 : vector<8x32xf32>
    %c0_51 = arith.constant 0 : index
    %c0_52 = arith.constant 0 : index
    %200 = vector.load %arg12[%c0_51, %c0_52] : memref<8x32xf32, #tpu.memory_space<vmem>>, vector<8x32xf32>
    tpu.vector_store %arg12[%c0_51, %c0_52], %199 {strides = array<i32>} : memref<8x32xf32, #tpu.memory_space<vmem>>, vector<8x32xf32>,
    return
  }
  func.func @transform_0(%arg0: i32) -> (i32, i32) {
    %c0_i32 = arith.constant 0 : i32
    %c0_i32_0 = arith.constant 0 : i32
    return %c0_i32, %arg0 : i32, i32
  }
  func.func @transform_1(%arg0: i32) -> (i32, i32) {
    %c0_i32 = arith.constant 0 : i32
    %c0_i32_0 = arith.constant 0 : i32
    %c0_i32_1 = arith.constant 0 : i32
    return %c0_i32, %c0_i32_0 : i32, i32
  }
  func.func @transform_2(%arg0: i32) -> (i32, i32) {
    %c0_i32 = arith.constant 0 : i32
    %c0_i32_0 = arith.constant 0 : i32
    %c0_i32_1 = arith.constant 0 : i32
    return %c0_i32, %c0_i32_0 : i32, i32
  }
  func.func @transform_3(%arg0: i32) -> (i32, i32) {
    %c0_i32 = arith.constant 0 : i32
    %c0_i32_0 = arith.constant 0 : i32
    %c0_i32_1 = arith.constant 0 : i32
    return %c0_i32, %c0_i32_0 : i32, i32
  }
  func.func @transform_4(%arg0: i32) -> (i32, i32) {
    %c0_i32 = arith.constant 0 : i32
    %c0_i32_0 = arith.constant 0 : i32
    %c0_i32_1 = arith.constant 0 : i32
    return %c0_i32, %c0_i32_0 : i32, i32
  }
  func.func @transform_5(%arg0: i32) -> (i32, i32) {
    %c0_i32 = arith.constant 0 : i32
    %c0_i32_0 = arith.constant 0 : i32
    %c0_i32_1 = arith.constant 0 : i32
    return %c0_i32, %c0_i32_0 : i32, i32
  }
  func.func @transform_6(%arg0: i32) -> (i32, i32) {
    %c0_i32 = arith.constant 0 : i32
    %c0_i32_0 = arith.constant 0 : i32
    %c0_i32_1 = arith.constant 0 : i32
    return %c0_i32, %c0_i32_0 : i32, i32
  }
  func.func @transform_7(%arg0: i32) -> (i32, i32) {
    %c0_i32 = arith.constant 0 : i32
    %c0_i32_0 = arith.constant 0 : i32
    %c0_i32_1 = arith.constant 0 : i32
    return %c0_i32, %c0_i32_0 : i32, i32
  }
  func.func @transform_8(%arg0: i32) -> (i32, i32) {
    %c0_i32 = arith.constant 0 : i32
    %c0_i32_0 = arith.constant 0 : i32
    %c0_i32_1 = arith.constant 0 : i32
    return %c0_i32, %c0_i32_0 : i32, i32
  }
  func.func @transform_9(%arg0: i32) -> (i32, i32) {
    %c0_i32 = arith.constant 0 : i32
    %c0_i32_0 = arith.constant 0 : i32
    %c0_i32_1 = arith.constant 0 : i32
    return %c0_i32, %c0_i32_0 : i32, i32
  }
  func.func @transform_10(%arg0: i32) -> (i32, i32) {
    %c0_i32 = arith.constant 0 : i32
    %c0_i32_0 = arith.constant 0 : i32
    %c0_i32_1 = arith.constant 0 : i32
    return %c0_i32, %c0_i32_0 : i32, i32
  }
  func.func @transform_11(%arg0: i32) -> (i32, i32) {
    %c0_i32 = arith.constant 0 : i32
    %c0_i32_0 = arith.constant 0 : i32
    return %c0_i32, %arg0 : i32, i32
  }
}

</mosaic_0001>

<llo_original>
// kernel: tpu_custom_call.1
$region0: #{tpu_custom_call.1}
  #allocation0 [shape = 'u32[]', space=smem, size = 0x4, offset = 0x4, fixed_abs, tag = 'smem constant byte address 0x4 - core index']
  #allocation1 [shape = 'u32[72,128]{1,0:T(1,128)}', space=vmem, size = 0x9000, scoped, tag = 'internal scratch']
  %s0 = inlined_call_operand.vmem [shape: f32[4,32], index: 0, kind: input, shape index: {}]
  %s1 = inlined_call_operand.vmem [shape: bf16[8,12], index: 1, kind: input, shape index: {}]
  %s2 = inlined_call_operand.vmem [shape: f32[8,1], index: 2, kind: input, shape index: {}]
  %s3 = inlined_call_operand.vmem [shape: bf16[8,24], index: 3, kind: input, shape index: {}]
  %s4 = inlined_call_operand.vmem [shape: f32[8,1], index: 4, kind: input, shape index: {}]
  %s5 = inlined_call_operand.vmem [shape: bf16[8,4], index: 5, kind: input, shape index: {}]
  %s6 = inlined_call_operand.vmem [shape: f32[8,1], index: 6, kind: input, shape index: {}]
  %s7 = inlined_call_operand.vmem [shape: bf16[24,8], index: 7, kind: input, shape index: {}]
  %s8 = inlined_call_operand.vmem [shape: f32[24,1], index: 8, kind: input, shape index: {}]
  %s9 = inlined_call_operand.vmem [shape: bf16[8,8], index: 9, kind: input, shape index: {}]
  %s10 = inlined_call_operand.vmem [shape: f32[8,1], index: 10, kind: input, shape index: {}]
  %s11 = inlined_call_operand.hbm [shape: f32[8,32], index: 11, kind: output, shape index: {}]
  %s12 = sld [smem:[#allocation0]]
  $region54: #{tpu_custom_call.1} parent=0
    _
  %s14 = ssub.s32 1, %s12
  %s15 = scalar_select 0, %s14, %s12
  $region1: #{tpu_custom_call.1} parent=0
    #allocation2 [shape = 'u8[4096]{0}', space=vmem, size = 0x1000, scoped, tag = 'output window, operand 0, single buffered']
    #allocation3 [shape = 's32[1]{0}', space=sflag, size = 0x4, scoped, tag = 'scoped memory for tpu_custom_call.1']
    %16 = vsyncpa [#allocation3], 0
    // Predicated region
    $region2: #{tpu_custom_call.1} parent=1 // pred_check
      _
    $region3: #{tpu_custom_call.1} parent=1 // pred_check_branch
      %18 = sbr.rel (0) target = $region5
    $region4: #{tpu_custom_call.1} parent=1 // pred_region
      _
    $region5: #{tpu_custom_call.1} parent=1 // pred_fallthru
      _
    // Predicated region
    $region6: #{tpu_custom_call.1} parent=1 // pred_check
      _
    $region7: #{tpu_custom_call.1} parent=1 // pred_check_branch
      %20 = sbr.rel (0) target = $region9
    $region8: #{tpu_custom_call.1} parent=1 // pred_region
      _
    $region9: #{tpu_custom_call.1} parent=1 // pred_fallthru
      _
    // Predicated region
    $region10: #{tpu_custom_call.1} parent=1 // pred_check
      _
    $region11: #{tpu_custom_call.1} parent=1 // pred_check_branch
      %22 = sbr.rel (0) target = $region13
    $region12: #{tpu_custom_call.1} parent=1 // pred_region
      _
    $region13: #{tpu_custom_call.1} parent=1 // pred_fallthru
      _
    // Predicated region
    $region14: #{tpu_custom_call.1} parent=1 // pred_check
      _
    $region15: #{tpu_custom_call.1} parent=1 // pred_check_branch
      %24 = sbr.rel (0) target = $region17
    $region16: #{tpu_custom_call.1} parent=1 // pred_region
      _
    $region17: #{tpu_custom_call.1} parent=1 // pred_fallthru
      _
    // Predicated region
    $region18: #{tpu_custom_call.1} parent=1 // pred_check
      _
    $region19: #{tpu_custom_call.1} parent=1 // pred_check_branch
      %26 = sbr.rel (0) target = $region21
    $region20: #{tpu_custom_call.1} parent=1 // pred_region
      _
    $region21: #{tpu_custom_call.1} parent=1 // pred_fallthru
      _
    // Predicated region
    $region22: #{tpu_custom_call.1} parent=1 // pred_check
      _
    $region23: #{tpu_custom_call.1} parent=1 // pred_check_branch
      %28 = sbr.rel (0) target = $region25
    $region24: #{tpu_custom_call.1} parent=1 // pred_region
      _
    $region25: #{tpu_custom_call.1} parent=1 // pred_fallthru
      _
    // Predicated region
    $region26: #{tpu_custom_call.1} parent=1 // pred_check
      _
    $region27: #{tpu_custom_call.1} parent=1 // pred_check_branch
      %30 = sbr.rel (0) target = $region29
    $region28: #{tpu_custom_call.1} parent=1 // pred_region
      _
    $region29: #{tpu_custom_call.1} parent=1 // pred_fallthru
      _
    // Predicated region
    $region30: #{tpu_custom_call.1} parent=1 // pred_check
      _
    $region31: #{tpu_custom_call.1} parent=1 // pred_check_branch
      %32 = sbr.rel (0) target = $region33
    $region32: #{tpu_custom_call.1} parent=1 // pred_region
      _
    $region33: #{tpu_custom_call.1} parent=1 // pred_fallthru
      _
    // Predicated region
    $region34: #{tpu_custom_call.1} parent=1 // pred_check
      _
    $region35: #{tpu_custom_call.1} parent=1 // pred_check_branch
      %34 = sbr.rel (0) target = $region37
    $region36: #{tpu_custom_call.1} parent=1 // pred_region
      _
    $region37: #{tpu_custom_call.1} parent=1 // pred_fallthru
      _
    // Predicated region
    $region38: #{tpu_custom_call.1} parent=1 // pred_check
      _
    $region39: #{tpu_custom_call.1} parent=1 // pred_check_branch
      %36 = sbr.rel (0) target = $region41
    $region40: #{tpu_custom_call.1} parent=1 // pred_region
      _
    $region41: #{tpu_custom_call.1} parent=1 // pred_fallthru
      _
    // Predicated region
    $region42: #{tpu_custom_call.1} parent=1 // pred_check
      _
    $region43: #{tpu_custom_call.1} parent=1 // pred_check_branch
      %38 = sbr.rel (0) target = $region45
    $region44: #{tpu_custom_call.1} parent=1 // pred_region
      _
    $region45: #{tpu_custom_call.1} parent=1 // pred_fallthru
      _
    %v40 = vlaneseq
    %v41 = vand.u32 %v40, 127
    %vm42 = vcmp.lt.s32.totalorder %v41, 0
    %v43 = vsub.s32 0, %v41
    %v44 = vsel %vm42, %v43, %v41
    %v45 = vshrl.u32 %v44, 4
    %v46 = vand.u32 %v44, 15
    %v47 = vsub.s32 0, %v46
    %v48 = vsel %vm42, %v47, %v46
    %vm49 = vcmp.ne.s32.totalorder %v48, 0
    %vm50 = vcmp.lt.s32.totalorder %v48, 0
    %vm51 = vmand %vm50, %vm49
    %v52 = vadd.s32 %v48, 16
    %v53 = vsel %vm51, %v52, %v48
    %v54 = vld [vmem:[%s0] sm:$0xf]
    %vm55 = vcmp.ge.s32.totalorder %v53, 4
    %vm56 = vcmask 1047808
    %57 = vrot.lane.b32.xlu0 %v54, 32
    %v58 = vpop.permute.xlu0 %57
    %v59 = vsel %vm56, %v58, %v54
    %60 = vrot.lane.b32.xlu0 %v59, 32
    %v61 = vpop.permute.xlu0 %60
    %v62 = vsel %vm56, %v61, %v54
    %v63 = vsel %vm55, 1, 0
    %vm64 = vcmp.eq.s32.totalorder %v63, 1
    %66 = vrot.lane.b32.xlu0 %v62, 100
    %v67 = vpop.permute.xlu0 %66
    %v69 = vsel %vm64, %v67, 0.0
    %vm70 = vcmp.ge.s32.totalorder %v53, 2
    %v71 = vsel %vm70, 1, 0
    %vm72 = vcmp.eq.s32.totalorder %v71, 1
    %73 = vrot.lane.b32.xlu0 %v62, 98
    %v74 = vpop.permute.xlu0 %73
    %v76 = vsel %vm72, %v74, 0.0
    %v78 = vrot.slane %v76, 4
    %vm80 = vcmask 1043456
    %v81 = vsel %vm80, %v69, %v78
    %v82 = vpack.c.bf16 %v54, %v81
    %v83 = vld [vmem:[%s1] sm:$0xf]
    %v84 = vld [vmem:[%s2] sm:$0xff]
    %86 = vset.pattern.permute.xlu0 0
    %87 = vperm.xlu0 %86, %v84
    %v88 = vpop.permute.xlu0 %87
    %vm90 = vcmask 97280
    %v92 = vsel %vm90, %v83, 0
    %vm94 = vcmask 1045504
    %v96 = vsel %vm94, %v82, 0
    %98 = vmatpush.bf16.msra.mxu0 0
    %99 = vmatpush.bf16.msra.mxu0 0
    %100 = vmatpush.bf16.msra.mxu0 0
    %101 = vmatpush.bf16.msra.mxu0 0
    %102 = vmatpush.bf16.msra.mxu0 0
    %103 = vmatpush.bf16.msra.mxu0 0
    %104 = vmatpush.bf16.msra.mxu0 0
    %105 = vmatpush.bf16.msra.mxu0 %v96
    %106 = vmatmul.bf16.gmra.mxu0 %v92
    %v107 = vpop.f32.mrf.mxu0
    %v108 = vadd.f32 %v88, %v107
    %v109 = vpop.f32.mrf.mxu0
    %110 = vdwg.mxu0
    %v111 = vmax.f32 %v108, 0.0
    %112 = vrot.lane.b32.xlu0 %v111, 32
    %v113 = vpop.permute.xlu0 %112
    %v114 = vsel %vm56, %v113, %v111
    %115 = vrot.lane.b32.xlu0 %v114, 32
    %v116 = vpop.permute.xlu0 %115
    %v117 = vsel %vm56, %v116, %v111
    %119 = vrot.lane.b32.xlu0 %v117, 100
    %v120 = vpop.permute.xlu0 %119
    %v122 = vsel %vm64, %v120, 0.0
    %123 = vrot.lane.b32.xlu0 %v117, 98
    %v124 = vpop.permute.xlu0 %123
    %v126 = vsel %vm72, %v124, 0.0
    %v127 = vpack.c.bf16 %v126, %v122
    %v128 = vpack.c.bf16 %v111, %v111
    %v129 = vld [vmem:[%s3] sm:$0xf]
    %v130 = vld [vmem:[%s4] sm:$0xff]
    %132 = vset.pattern.permute.xlu0 0
    %133 = vperm.xlu0 %132, %v130
    %v134 = vpop.permute.xlu0 %133
    %vm136 = vcmask 195584
    %v138 = vsel %vm136, %v129, 0
    %v141 = vsel %vm80, %v128, 0
    %143 = vmatpush.bf16.msra.mxu0 0
    %144 = vmatpush.bf16.msra.mxu0 0
    %145 = vmatpush.bf16.msra.mxu0 0
    %146 = vmatpush.bf16.msra.mxu0 0
    %147 = vmatpush.bf16.msra.mxu0 0
    %148 = vmatpush.bf16.msra.mxu0 0
    %149 = vmatpush.bf16.msra.mxu0 %v141
    %150 = vmatpush.bf16.msra.mxu0 %v127
    %151 = vmatmul.bf16.gmra.mxu0 %v138
    %v152 = vpop.f32.mrf.mxu0
    %v153 = vadd.f32 %v134, %v152
    %v154 = vpop.f32.mrf.mxu0
    %155 = vdwg.mxu0
    %v156 = vmax.f32 %v153, 0.0
    %v157 = vld [vmem:[%s5] sm:$0xf]
    %v158 = vpack.c.bf16 %v54, %v54
    %v159 = vld [vmem:[%s6] sm:$0xff]
    %161 = vset.pattern.permute.xlu0 0
    %162 = vperm.xlu0 %161, %v159
    %v163 = vpop.permute.xlu0 %162
    %vm165 = vcmask 31744
    %v167 = vsel %vm165, %v157, 0
    %vm169 = vcmask 1041408
    %v171 = vsel %vm169, %v158, 0
    %173 = vmatpush.bf16.msra.mxu0 0
    %174 = vmatpush.bf16.msra.mxu0 0
    %175 = vmatpush.bf16.msra.mxu0 0
    %176 = vmatpush.bf16.msra.mxu0 0
    %177 = vmatpush.bf16.msra.mxu0 0
    %178 = vmatpush.bf16.msra.mxu0 0
    %179 = vmatpush.bf16.msra.mxu0 0
    %180 = vmatpush.bf16.msra.mxu0 %v171
    %181 = vmatmul.bf16.gmra.mxu0 %v167
    %v182 = vpop.f32.mrf.mxu0
    %v183 = vadd.f32 %v163, %v182
    %v184 = vpop.f32.mrf.mxu0
    %185 = vdwg.mxu0
    %v186 = vld [vmem:[%s7] sm:$0xf]
    %v187 = vld [vmem:[%s7 + $0x4] sm:$0xf]
    %v188 = vld [vmem:[%s7 + $0x8] sm:$0xf]
    %v189 = vpack.c.bf16 %v156, %v156
    %v190 = vld [vmem:[%s8] sm:$0xff]
    %v191 = vld [vmem:[%s8 + $0x8] sm:$0xff]
    %v192 = vld [vmem:[%s8 + $0x10] sm:$0xff]
    %194 = vset.pattern.permute.xlu0 0
    %195 = vperm.xlu0 %194, %v190
    %v196 = vpop.permute.xlu0 %195
    %199 = vset.pattern.permute.xlu0 0
    %200 = vperm.xlu0 %199, %v191
    %v201 = vpop.permute.xlu0 %200
    %204 = vset.pattern.permute.xlu0 0
    %205 = vperm.xlu0 %204, %v192
    %v206 = vpop.permute.xlu0 %205
    %v211 = vunpack.c.l.b16 %v186
    %v212 = vunpack.c.l.b16 %v187
    %v213 = vunpack.c.l.b16 %v188
    %v214 = vpack.c.b16 %v212, %v211
    %v215 = vpack.c.b16 %v213, %v213
    %vm216 = vcmask 64512
    %v218 = vsel %vm216, %v214, 0
    %v221 = vsel %vm216, %v215, 0
    %v224 = vsel %vm80, %v189, 0
    %226 = vmatpush.bf16.msra.mxu0 0
    %227 = vmatpush.bf16.msra.mxu0 0
    %228 = vmatpush.bf16.msra.mxu0 0
    %229 = vmatpush.bf16.msra.mxu0 0
    %230 = vmatpush.bf16.msra.mxu0 0
    %231 = vmatpush.bf16.msra.mxu0 0
    %232 = vmatpush.bf16.msra.mxu0 0
    %233 = vmatpush.bf16.msra.mxu0 %v224
    %234 = vmatmul.bf16.gmra.mxu0 %v218
    %v235 = vpop.f32.mrf.mxu0
    %v236 = vadd.f32 %v196, %v235
    %v237 = vpop.f32.mrf.mxu0
    %v238 = vadd.f32 %v201, %v237
    %239 = vmatmul.bf16.gmra.mxu0 %v221
    %v240 = vpop.f32.mrf.mxu0
    %v241 = vadd.f32 %v206, %v240
    %v242 = vpop.f32.mrf.mxu0
    %243 = vdwg.mxu0
    %v244 = vmul.f32 %v236, 0.70710677
    %v246 = vrot.slane %v244, 2
    %v248 = vrot.slane %v244, 4
    %v250 = vrot.slane %v244, 6
    %v252 = vpack.c.bf16 %v244, %v244
    %v253 = vpack.c.bf16 %v246, %v246
    %v254 = vpack.c.bf16 %v248, %v248
    %v255 = vpack.c.bf16 %v250, %v250
    %v257 = vrot.slane %v238, 2
    %v259 = vrot.slane %v238, 4
    %v261 = vrot.slane %v238, 6
    %v263 = vpack.c.bf16 %v238, %v238
    %v264 = vpack.c.bf16 %v257, %v257
    %v265 = vpack.c.bf16 %v259, %v259
    %v266 = vpack.c.bf16 %v261, %v261
    %v268 = vrot.slane %v241, 2
    %v270 = vrot.slane %v241, 4
    %v272 = vrot.slane %v241, 6
    %v274 = vpack.c.bf16 %v241, %v241
    %v275 = vpack.c.bf16 %v268, %v268
    %v276 = vpack.c.bf16 %v270, %v270
    %v277 = vpack.c.bf16 %v272, %v272
    %278 = vxpose.xlu0.c.b16.start [1/8] %v252, 128
    %279 = vxpose.xlu0.c.b16.cont [2/8] 0, 128
    %280 = vxpose.xlu0.c.b16.cont [3/8] 0, 128
    %281 = vxpose.xlu0.c.b16.cont [4/8] 0, 128
    %282 = vxpose.xlu0.c.b16.cont [5/8] 0, 128
    %283 = vxpose.xlu0.c.b16.cont [6/8] 0, 128
    %284 = vxpose.xlu0.c.b16.cont [7/8] 0, 128
    %285 = vxpose.xlu0.c.b16.end [8/8] 0, 128
    %v286 = vpop.trf.xlu0
    %v287 = vpop.trf.xlu0
    %v288 = vpop.trf.xlu0
    %v289 = vpop.trf.xlu0
    %v290 = vpop.trf.xlu0
    %v291 = vpop.trf.xlu0
    %v292 = vpop.trf.xlu0
    %v293 = vpop.trf.xlu0
    %vm294 = vcmask 15360
    %v296 = vsel %vm294, %v286, 0
    %vm298 = vcmask 1040384
    %v300 = vsel %vm298, %v263, 0
    %302 = vmatpush.bf16.msra.mxu0 0
    %303 = vmatpush.bf16.msra.mxu0 0
    %304 = vmatpush.bf16.msra.mxu0 0
    %305 = vmatpush.bf16.msra.mxu0 0
    %306 = vmatpush.bf16.msra.mxu0 0
    %307 = vmatpush.bf16.msra.mxu0 0
    %308 = vmatpush.bf16.msra.mxu0 0
    %309 = vmatpush.bf16.msra.mxu0 %v300
    %310 = vmatmul.bf16.gmra.mxu0 %v296
    %v311 = vpop.f32.mrf.mxu0
    %v312 = vadd.f32 0.0, %v311
    %v313 = vpop.f32.mrf.mxu0
    %v314 = vadd.f32 0.0, %v313
    %315 = vdwg.mxu0
    %316 = vxpose.xlu0.c.b16.start [1/8] %v253, 128
    %317 = vxpose.xlu0.c.b16.cont [2/8] 0, 128
    %318 = vxpose.xlu0.c.b16.cont [3/8] 0, 128
    %319 = vxpose.xlu0.c.b16.cont [4/8] 0, 128
    %320 = vxpose.xlu0.c.b16.cont [5/8] 0, 128
    %321 = vxpose.xlu0.c.b16.cont [6/8] 0, 128
    %322 = vxpose.xlu0.c.b16.cont [7/8] 0, 128
    %323 = vxpose.xlu0.c.b16.end [8/8] 0, 128
    %v324 = vpop.trf.xlu0
    %v325 = vpop.trf.xlu0
    %v326 = vpop.trf.xlu0
    %v327 = vpop.trf.xlu0
    %v328 = vpop.trf.xlu0
    %v329 = vpop.trf.xlu0
    %v330 = vpop.trf.xlu0
    %v331 = vpop.trf.xlu0
    %v333 = vsel %vm294, %v324, 0
    %v336 = vsel %vm298, %v264, 0
    %338 = vmatpush.bf16.msra.mxu0 0
    %339 = vmatpush.bf16.msra.mxu0 0
    %340 = vmatpush.bf16.msra.mxu0 0
    %341 = vmatpush.bf16.msra.mxu0 0
    %342 = vmatpush.bf16.msra.mxu0 0
    %343 = vmatpush.bf16.msra.mxu0 0
    %344 = vmatpush.bf16.msra.mxu0 0
    %345 = vmatpush.bf16.msra.mxu0 %v336
    %346 = vmatmul.bf16.gmra.mxu0 %v333
    %v347 = vpop.f32.mrf.mxu0
    %v348 = vadd.f32 0.0, %v347
    %v349 = vpop.f32.mrf.mxu0
    %v350 = vadd.f32 0.0, %v349
    %351 = vdwg.mxu0
    %352 = vxpose.xlu0.c.b16.start [1/8] %v254, 128
    %353 = vxpose.xlu0.c.b16.cont [2/8] 0, 128
    %354 = vxpose.xlu0.c.b16.cont [3/8] 0, 128
    %355 = vxpose.xlu0.c.b16.cont [4/8] 0, 128
    %356 = vxpose.xlu0.c.b16.cont [5/8] 0, 128
    %357 = vxpose.xlu0.c.b16.cont [6/8] 0, 128
    %358 = vxpose.xlu0.c.b16.cont [7/8] 0, 128
    %359 = vxpose.xlu0.c.b16.end [8/8] 0, 128
    %v360 = vpop.trf.xlu0
    %v361 = vpop.trf.xlu0
    %v362 = vpop.trf.xlu0
    %v363 = vpop.trf.xlu0
    %v364 = vpop.trf.xlu0
    %v365 = vpop.trf.xlu0
    %v366 = vpop.trf.xlu0
    %v367 = vpop.trf.xlu0
    %v369 = vsel %vm294, %v360, 0
    %v372 = vsel %vm298, %v265, 0
    %374 = vmatpush.bf16.msra.mxu0 0
    %375 = vmatpush.bf16.msra.mxu0 0
    %376 = vmatpush.bf16.msra.mxu0 0
    %377 = vmatpush.bf16.msra.mxu0 0
    %378 = vmatpush.bf16.msra.mxu0 0
    %379 = vmatpush.bf16.msra.mxu0 0
    %380 = vmatpush.bf16.msra.mxu0 0
    %381 = vmatpush.bf16.msra.mxu0 %v372
    %382 = vmatmul.bf16.gmra.mxu0 %v369
    %v383 = vpop.f32.mrf.mxu0
    %v384 = vadd.f32 0.0, %v383
    %v385 = vpop.f32.mrf.mxu0
    %v386 = vadd.f32 0.0, %v385
    %387 = vdwg.mxu0
    %388 = vxpose.xlu0.c.b16.start [1/8] %v255, 128
    %389 = vxpose.xlu0.c.b16.cont [2/8] 0, 128
    %390 = vxpose.xlu0.c.b16.cont [3/8] 0, 128
    %391 = vxpose.xlu0.c.b16.cont [4/8] 0, 128
    %392 = vxpose.xlu0.c.b16.cont [5/8] 0, 128
    %393 = vxpose.xlu0.c.b16.cont [6/8] 0, 128
    %394 = vxpose.xlu0.c.b16.cont [7/8] 0, 128
    %395 = vxpose.xlu0.c.b16.end [8/8] 0, 128
    %v396 = vpop.trf.xlu0
    %v397 = vpop.trf.xlu0
    %v398 = vpop.trf.xlu0
    %v399 = vpop.trf.xlu0
    %v400 = vpop.trf.xlu0
    %v401 = vpop.trf.xlu0
    %v402 = vpop.trf.xlu0
    %v403 = vpop.trf.xlu0
    %v405 = vsel %vm294, %v396, 0
    %v408 = vsel %vm298, %v266, 0
    %410 = vmatpush.bf16.msra.mxu0 0
    %411 = vmatpush.bf16.msra.mxu0 0
    %412 = vmatpush.bf16.msra.mxu0 0
    %413 = vmatpush.bf16.msra.mxu0 0
    %414 = vmatpush.bf16.msra.mxu0 0
    %415 = vmatpush.bf16.msra.mxu0 0
    %416 = vmatpush.bf16.msra.mxu0 0
    %417 = vmatpush.bf16.msra.mxu0 %v408
    %418 = vmatmul.bf16.gmra.mxu0 %v405
    %v419 = vpop.f32.mrf.mxu0
    %v420 = vadd.f32 0.0, %v419
    %v421 = vpop.f32.mrf.mxu0
    %v422 = vadd.f32 0.0, %v421
    %423 = vdwg.mxu0
    %vm424 = vcmask 130048
    %v425 = vsel %vm424, %v312, -inf
    %426 = vmax.xlane.f32.xlu0 %v425
    %v427 = vpop.xlane.xlu0 %426
    %v428 = vsel %vm424, %v314, -inf
    %429 = vmax.xlane.f32.xlu0 %v428
    %v430 = vpop.xlane.xlu0 %429
    %v431 = vsel %vm424, %v348, -inf
    %432 = vmax.xlane.f32.xlu0 %v431
    %v433 = vpop.xlane.xlu0 %432
    %v434 = vsel %vm424, %v350, -inf
    %435 = vmax.xlane.f32.xlu0 %v434
    %v436 = vpop.xlane.xlu0 %435
    %v437 = vsel %vm424, %v384, -inf
    %438 = vmax.xlane.f32.xlu0 %v437
    %v439 = vpop.xlane.xlu0 %438
    %v440 = vsel %vm424, %v386, -inf
    %441 = vmax.xlane.f32.xlu0 %v440
    %v442 = vpop.xlane.xlu0 %441
    %v443 = vsel %vm424, %v420, -inf
    %444 = vmax.xlane.f32.xlu0 %v443
    %v445 = vpop.xlane.xlu0 %444
    %v446 = vsel %vm424, %v422, -inf
    %447 = vmax.xlane.f32.xlu0 %v446
    %v448 = vpop.xlane.xlu0 %447
    %v449 = vsub.f32 %v312, %v427
    %v450 = vsub.f32 %v314, %v430
    %v451 = vsub.f32 %v348, %v433
    %v452 = vsub.f32 %v350, %v436
    %v453 = vsub.f32 %v384, %v439
    %v454 = vsub.f32 %v386, %v442
    %v455 = vsub.f32 %v420, %v445
    %v456 = vsub.f32 %v422, %v448
    %v457 = vmul.f32 %v449, 1.442695
    %v458 = vpow.pop %v457
    %v459 = vmul.f32 %v450, 1.442695
    %v460 = vpow.pop %v459
    %v461 = vmul.f32 %v451, 1.442695
    %v462 = vpow.pop %v461
    %v463 = vmul.f32 %v452, 1.442695
    %v464 = vpow.pop %v463
    %v465 = vmul.f32 %v453, 1.442695
    %v466 = vpow.pop %v465
    %v467 = vmul.f32 %v454, 1.442695
    %v468 = vpow.pop %v467
    %v469 = vmul.f32 %v455, 1.442695
    %v470 = vpow.pop %v469
    %v471 = vmul.f32 %v456, 1.442695
    %v472 = vpow.pop %v471
    %v473 = vsel %vm424, %v458, 0.0
    %474 = vadd.xlane.f32.xlu0 %v473
    %v475 = vpop.xlane.xlu0 %474
    %v476 = vsel %vm424, %v460, 0.0
    %477 = vadd.xlane.f32.xlu0 %v476
    %v478 = vpop.xlane.xlu0 %477
    %v479 = vsel %vm424, %v462, 0.0
    %480 = vadd.xlane.f32.xlu0 %v479
    %v481 = vpop.xlane.xlu0 %480
    %v482 = vsel %vm424, %v464, 0.0
    %483 = vadd.xlane.f32.xlu0 %v482
    %v484 = vpop.xlane.xlu0 %483
    %v485 = vsel %vm424, %v466, 0.0
    %486 = vadd.xlane.f32.xlu0 %v485
    %v487 = vpop.xlane.xlu0 %486
    %v488 = vsel %vm424, %v468, 0.0
    %489 = vadd.xlane.f32.xlu0 %v488
    %v490 = vpop.xlane.xlu0 %489
    %v491 = vsel %vm424, %v470, 0.0
    %492 = vadd.xlane.f32.xlu0 %v491
    %v493 = vpop.xlane.xlu0 %492
    %v494 = vsel %vm424, %v472, 0.0
    %495 = vadd.xlane.f32.xlu0 %v494
    %v496 = vpop.xlane.xlu0 %495
    %v497 = vrcp.pop %v475
    %v498 = vrcp.pop %v478
    %v499 = vrcp.pop %v481
    %v500 = vrcp.pop %v484
    %v501 = vrcp.pop %v487
    %v502 = vrcp.pop %v490
    %v503 = vrcp.pop %v493
    %v504 = vrcp.pop %v496
    %v505 = vmul.f32 %v458, %v497
    %v506 = vmul.f32 %v460, %v498
    %v507 = vmul.f32 %v462, %v499
    %v508 = vmul.f32 %v464, %v500
    %v509 = vmul.f32 %v466, %v501
    %v510 = vmul.f32 %v468, %v502
    %v511 = vmul.f32 %v470, %v503
    %v512 = vmul.f32 %v472, %v504
    %v513 = vpack.c.bf16 %v505, %v505
    %v514 = vpack.c.bf16 %v506, %v506
    %v515 = vpack.c.bf16 %v507, %v507
    %v516 = vpack.c.bf16 %v508, %v508
    %v517 = vpack.c.bf16 %v509, %v509
    %v518 = vpack.c.bf16 %v510, %v510
    %v519 = vpack.c.bf16 %v511, %v511
    %v520 = vpack.c.bf16 %v512, %v512
    %v523 = vunpack.c.l.b16 %v513
    %v524 = vunpack.c.l.b16 %v514
    %v525 = vpack.c.b16 %v524, %v523
    %v527 = vsel %vm424, %v274, 0
    %v530 = vsel %vm424, %v525, 0
    %532 = vmatpush.bf16.xpose.msra.mxu0 0
    %533 = vmatpush.bf16.xpose.msra.mxu0 0
    %534 = vmatpush.bf16.xpose.msra.mxu0 0
    %535 = vmatpush.bf16.xpose.msra.mxu0 0
    %536 = vmatpush.bf16.xpose.msra.mxu0 0
    %537 = vmatpush.bf16.xpose.msra.mxu0 0
    %538 = vmatpush.bf16.xpose.msra.mxu0 0
    %539 = vmatpush.bf16.xpose.msra.mxu0 %v530
    %540 = vmatmul.bf16.gmra.mxu0 %v527
    %v541 = vpop.f32.mrf.mxu0
    %v542 = vadd.f32 0.0, %v541
    %v543 = vpop.f32.mrf.mxu0
    %544 = vdwg.mxu0
    %v547 = vunpack.c.l.b16 %v515
    %v548 = vunpack.c.l.b16 %v516
    %v549 = vpack.c.b16 %v548, %v547
    %v551 = vsel %vm424, %v275, 0
    %v554 = vsel %vm424, %v549, 0
    %556 = vmatpush.bf16.xpose.msra.mxu0 0
    %557 = vmatpush.bf16.xpose.msra.mxu0 0
    %558 = vmatpush.bf16.xpose.msra.mxu0 0
    %559 = vmatpush.bf16.xpose.msra.mxu0 0
    %560 = vmatpush.bf16.xpose.msra.mxu0 0
    %561 = vmatpush.bf16.xpose.msra.mxu0 0
    %562 = vmatpush.bf16.xpose.msra.mxu0 0
    %563 = vmatpush.bf16.xpose.msra.mxu0 %v554
    %564 = vmatmul.bf16.gmra.mxu0 %v551
    %v565 = vpop.f32.mrf.mxu0
    %v566 = vadd.f32 0.0, %v565
    %v567 = vpop.f32.mrf.mxu0
    %568 = vdwg.mxu0
    %v571 = vunpack.c.l.b16 %v517
    %v572 = vunpack.c.l.b16 %v518
    %v573 = vpack.c.b16 %v572, %v571
    %v575 = vsel %vm424, %v276, 0
    %v578 = vsel %vm424, %v573, 0
    %580 = vmatpush.bf16.xpose.msra.mxu0 0
    %581 = vmatpush.bf16.xpose.msra.mxu0 0
    %582 = vmatpush.bf16.xpose.msra.mxu0 0
    %583 = vmatpush.bf16.xpose.msra.mxu0 0
    %584 = vmatpush.bf16.xpose.msra.mxu0 0
    %585 = vmatpush.bf16.xpose.msra.mxu0 0
    %586 = vmatpush.bf16.xpose.msra.mxu0 0
    %587 = vmatpush.bf16.xpose.msra.mxu0 %v578
    %588 = vmatmul.bf16.gmra.mxu0 %v575
    %v589 = vpop.f32.mrf.mxu0
    %v590 = vadd.f32 0.0, %v589
    %v591 = vpop.f32.mrf.mxu0
    %592 = vdwg.mxu0
    %v595 = vunpack.c.l.b16 %v519
    %v596 = vunpack.c.l.b16 %v520
    %v597 = vpack.c.b16 %v596, %v595
    %v599 = vsel %vm424, %v277, 0
    %v602 = vsel %vm424, %v597, 0
    %604 = vmatpush.bf16.xpose.msra.mxu0 0
    %605 = vmatpush.bf16.xpose.msra.mxu0 0
    %606 = vmatpush.bf16.xpose.msra.mxu0 0
    %607 = vmatpush.bf16.xpose.msra.mxu0 0
    %608 = vmatpush.bf16.xpose.msra.mxu0 0
    %609 = vmatpush.bf16.xpose.msra.mxu0 0
    %610 = vmatpush.bf16.xpose.msra.mxu0 0
    %611 = vmatpush.bf16.xpose.msra.mxu0 %v602
    %612 = vmatmul.bf16.gmra.mxu0 %v599
    %v613 = vpop.f32.mrf.mxu0
    %v614 = vadd.f32 0.0, %v613
    %v615 = vpop.f32.mrf.mxu0
    %616 = vdwg.mxu0
    %v618 = vrot.slane %v566, 6
    %v621 = vrot.slane %v590, 4
    %v624 = vrot.slane %v614, 2
    %v626 = vsel %vm169, %v542, %v618
    %v627 = vsel %vm80, %v626, %v621
    %v628 = vsel %vm94, %v627, %v624
    %v630 = vunpack.c.l.b16 %v252
    %v631 = vpack.c.b16 %v630, %v630
    %632 = vrot.lane.b32.xlu0 %v631, 112
    %v633 = vpop.permute.xlu0 %632
    %635 = vxpose.xlu0.c.b16.start [1/8] %v633, 128
    %636 = vxpose.xlu0.c.b16.cont [2/8] 0, 128
    %637 = vxpose.xlu0.c.b16.cont [3/8] 0, 128
    %638 = vxpose.xlu0.c.b16.cont [4/8] 0, 128
    %639 = vxpose.xlu0.c.b16.cont [5/8] 0, 128
    %640 = vxpose.xlu0.c.b16.cont [6/8] 0, 128
    %641 = vxpose.xlu0.c.b16.cont [7/8] 0, 128
    %642 = vxpose.xlu0.c.b16.end [8/8] 0, 128
    %v643 = vpop.trf.xlu0
    %v644 = vpop.trf.xlu0
    %v645 = vpop.trf.xlu0
    %v646 = vpop.trf.xlu0
    %v647 = vpop.trf.xlu0
    %v648 = vpop.trf.xlu0
    %v649 = vpop.trf.xlu0
    %v650 = vpop.trf.xlu0
    %v652 = vunpack.c.l.b16 %v263
    %v653 = vpack.c.b16 %v652, %v652
    %654 = vrot.lane.b32.xlu0 %v653, 112
    %v655 = vpop.permute.xlu0 %654
    %v657 = vsel %vm294, %v643, 0
    %v660 = vsel %vm298, %v655, 0
    %662 = vmatpush.bf16.msra.mxu0 0
    %663 = vmatpush.bf16.msra.mxu0 0
    %664 = vmatpush.bf16.msra.mxu0 0
    %665 = vmatpush.bf16.msra.mxu0 0
    %666 = vmatpush.bf16.msra.mxu0 0
    %667 = vmatpush.bf16.msra.mxu0 0
    %668 = vmatpush.bf16.msra.mxu0 0
    %669 = vmatpush.bf16.msra.mxu0 %v660
    %670 = vmatmul.bf16.gmra.mxu0 %v657
    %v671 = vpop.f32.mrf.mxu0
    %v672 = vadd.f32 0.0, %v671
    %v673 = vpop.f32.mrf.mxu0
    %v674 = vadd.f32 0.0, %v673
    %675 = vdwg.mxu0
    %v677 = vunpack.c.l.b16 %v253
    %v678 = vpack.c.b16 %v677, %v677
    %679 = vrot.lane.b32.xlu0 %v678, 112
    %v680 = vpop.permute.xlu0 %679
    %682 = vxpose.xlu0.c.b16.start [1/8] %v680, 128
    %683 = vxpose.xlu0.c.b16.cont [2/8] 0, 128
    %684 = vxpose.xlu0.c.b16.cont [3/8] 0, 128
    %685 = vxpose.xlu0.c.b16.cont [4/8] 0, 128
    %686 = vxpose.xlu0.c.b16.cont [5/8] 0, 128
    %687 = vxpose.xlu0.c.b16.cont [6/8] 0, 128
    %688 = vxpose.xlu0.c.b16.cont [7/8] 0, 128
    %689 = vxpose.xlu0.c.b16.end [8/8] 0, 128
    %v690 = vpop.trf.xlu0
    %v691 = vpop.trf.xlu0
    %v692 = vpop.trf.xlu0
    %v693 = vpop.trf.xlu0
    %v694 = vpop.trf.xlu0
    %v695 = vpop.trf.xlu0
    %v696 = vpop.trf.xlu0
    %v697 = vpop.trf.xlu0
    %v699 = vunpack.c.l.b16 %v264
    %v700 = vpack.c.b16 %v699, %v699
    %701 = vrot.lane.b32.xlu0 %v700, 112
    %v702 = vpop.permute.xlu0 %701
    %v704 = vsel %vm294, %v690, 0
    %v707 = vsel %vm298, %v702, 0
    %709 = vmatpush.bf16.msra.mxu0 0
    %710 = vmatpush.bf16.msra.mxu0 0
    %711 = vmatpush.bf16.msra.mxu0 0
    %712 = vmatpush.bf16.msra.mxu0 0
    %713 = vmatpush.bf16.msra.mxu0 0
    %714 = vmatpush.bf16.msra.mxu0 0
    %715 = vmatpush.bf16.msra.mxu0 0
    %716 = vmatpush.bf16.msra.mxu0 %v707
    %717 = vmatmul.bf16.gmra.mxu0 %v704
    %v718 = vpop.f32.mrf.mxu0
    %v719 = vadd.f32 0.0, %v718
    %v720 = vpop.f32.mrf.mxu0
    %v721 = vadd.f32 0.0, %v720
    %722 = vdwg.mxu0
    %v724 = vunpack.c.l.b16 %v254
    %v725 = vpack.c.b16 %v724, %v724
    %726 = vrot.lane.b32.xlu0 %v725, 112
    %v727 = vpop.permute.xlu0 %726
    %729 = vxpose.xlu0.c.b16.start [1/8] %v727, 128
    %730 = vxpose.xlu0.c.b16.cont [2/8] 0, 128
    %731 = vxpose.xlu0.c.b16.cont [3/8] 0, 128
    %732 = vxpose.xlu0.c.b16.cont [4/8] 0, 128
    %733 = vxpose.xlu0.c.b16.cont [5/8] 0, 128
    %734 = vxpose.xlu0.c.b16.cont [6/8] 0, 128
    %735 = vxpose.xlu0.c.b16.cont [7/8] 0, 128
    %736 = vxpose.xlu0.c.b16.end [8/8] 0, 128
    %v737 = vpop.trf.xlu0
    %v738 = vpop.trf.xlu0
    %v739 = vpop.trf.xlu0
    %v740 = vpop.trf.xlu0
    %v741 = vpop.trf.xlu0
    %v742 = vpop.trf.xlu0
    %v743 = vpop.trf.xlu0
    %v744 = vpop.trf.xlu0
    %v746 = vunpack.c.l.b16 %v265
    %v747 = vpack.c.b16 %v746, %v746
    %748 = vrot.lane.b32.xlu0 %v747, 112
    %v749 = vpop.permute.xlu0 %748
    %v751 = vsel %vm294, %v737, 0
    %v754 = vsel %vm298, %v749, 0
    %756 = vmatpush.bf16.msra.mxu0 0
    %757 = vmatpush.bf16.msra.mxu0 0
    %758 = vmatpush.bf16.msra.mxu0 0
    %759 = vmatpush.bf16.msra.mxu0 0
    %760 = vmatpush.bf16.msra.mxu0 0
    %761 = vmatpush.bf16.msra.mxu0 0
    %762 = vmatpush.bf16.msra.mxu0 0
    %763 = vmatpush.bf16.msra.mxu0 %v754
    %764 = vmatmul.bf16.gmra.mxu0 %v751
    %v765 = vpop.f32.mrf.mxu0
    %v766 = vadd.f32 0.0, %v765
    %v767 = vpop.f32.mrf.mxu0
    %v768 = vadd.f32 0.0, %v767
    %769 = vdwg.mxu0
    %v771 = vunpack.c.l.b16 %v255
    %v772 = vpack.c.b16 %v771, %v771
    %773 = vrot.lane.b32.xlu0 %v772, 112
    %v774 = vpop.permute.xlu0 %773
    %776 = vxpose.xlu0.c.b16.start [1/8] %v774, 128
    %777 = vxpose.xlu0.c.b16.cont [2/8] 0, 128
    %778 = vxpose.xlu0.c.b16.cont [3/8] 0, 128
    %779 = vxpose.xlu0.c.b16.cont [4/8] 0, 128
    %780 = vxpose.xlu0.c.b16.cont [5/8] 0, 128
    %781 = vxpose.xlu0.c.b16.cont [6/8] 0, 128
    %782 = vxpose.xlu0.c.b16.cont [7/8] 0, 128
    %783 = vxpose.xlu0.c.b16.end [8/8] 0, 128
    %v784 = vpop.trf.xlu0
    %v785 = vpop.trf.xlu0
    %v786 = vpop.trf.xlu0
    %v787 = vpop.trf.xlu0
    %v788 = vpop.trf.xlu0
    %v789 = vpop.trf.xlu0
    %v790 = vpop.trf.xlu0
    %v791 = vpop.trf.xlu0
    %v793 = vunpack.c.l.b16 %v266
    %v794 = vpack.c.b16 %v793, %v793
    %795 = vrot.lane.b32.xlu0 %v794, 112
    %v796 = vpop.permute.xlu0 %795
    %v798 = vsel %vm294, %v784, 0
    %v801 = vsel %vm298, %v796, 0
    %803 = vmatpush.bf16.msra.mxu0 0
    %804 = vmatpush.bf16.msra.mxu0 0
    %805 = vmatpush.bf16.msra.mxu0 0
    %806 = vmatpush.bf16.msra.mxu0 0
    %807 = vmatpush.bf16.msra.mxu0 0
    %808 = vmatpush.bf16.msra.mxu0 0
    %809 = vmatpush.bf16.msra.mxu0 0
    %810 = vmatpush.bf16.msra.mxu0 %v801
    %811 = vmatmul.bf16.gmra.mxu0 %v798
    %v812 = vpop.f32.mrf.mxu0
    %v813 = vadd.f32 0.0, %v812
    %v814 = vpop.f32.mrf.mxu0
    %v815 = vadd.f32 0.0, %v814
    %816 = vdwg.mxu0
    %v817 = vsel %vm424, %v672, -inf
    %818 = vmax.xlane.f32.xlu0 %v817
    %v819 = vpop.xlane.xlu0 %818
    %v820 = vsel %vm424, %v674, -inf
    %821 = vmax.xlane.f32.xlu0 %v820
    %v822 = vpop.xlane.xlu0 %821
    %v823 = vsel %vm424, %v719, -inf
    %824 = vmax.xlane.f32.xlu0 %v823
    %v825 = vpop.xlane.xlu0 %824
    %v826 = vsel %vm424, %v721, -inf
    %827 = vmax.xlane.f32.xlu0 %v826
    %v828 = vpop.xlane.xlu0 %827
    %v829 = vsel %vm424, %v766, -inf
    %830 = vmax.xlane.f32.xlu0 %v829
    %v831 = vpop.xlane.xlu0 %830
    %v832 = vsel %vm424, %v768, -inf
    %833 = vmax.xlane.f32.xlu0 %v832
    %v834 = vpop.xlane.xlu0 %833
    %v835 = vsel %vm424, %v813, -inf
    %836 = vmax.xlane.f32.xlu0 %v835
    %v837 = vpop.xlane.xlu0 %836
    %v838 = vsel %vm424, %v815, -inf
    %839 = vmax.xlane.f32.xlu0 %v838
    %v840 = vpop.xlane.xlu0 %839
    %v841 = vsub.f32 %v672, %v819
    %v842 = vsub.f32 %v674, %v822
    %v843 = vsub.f32 %v719, %v825
    %v844 = vsub.f32 %v721, %v828
    %v845 = vsub.f32 %v766, %v831
    %v846 = vsub.f32 %v768, %v834
    %v847 = vsub.f32 %v813, %v837
    %v848 = vsub.f32 %v815, %v840
    %v849 = vmul.f32 %v841, 1.442695
    %v850 = vpow.pop %v849
    %v851 = vmul.f32 %v842, 1.442695
    %v852 = vpow.pop %v851
    %v853 = vmul.f32 %v843, 1.442695
    %v854 = vpow.pop %v853
    %v855 = vmul.f32 %v844, 1.442695
    %v856 = vpow.pop %v855
    %v857 = vmul.f32 %v845, 1.442695
    %v858 = vpow.pop %v857
    %v859 = vmul.f32 %v846, 1.442695
    %v860 = vpow.pop %v859
    %v861 = vmul.f32 %v847, 1.442695
    %v862 = vpow.pop %v861
    %v863 = vmul.f32 %v848, 1.442695
    %v864 = vpow.pop %v863
    %v865 = vsel %vm424, %v850, 0.0
    %866 = vadd.xlane.f32.xlu0 %v865
    %v867 = vpop.xlane.xlu0 %866
    %v868 = vsel %vm424, %v852, 0.0
    %869 = vadd.xlane.f32.xlu0 %v868
    %v870 = vpop.xlane.xlu0 %869
    %v871 = vsel %vm424, %v854, 0.0
    %872 = vadd.xlane.f32.xlu0 %v871
    %v873 = vpop.xlane.xlu0 %872
    %v874 = vsel %vm424, %v856, 0.0
    %875 = vadd.xlane.f32.xlu0 %v874
    %v876 = vpop.xlane.xlu0 %875
    %v877 = vsel %vm424, %v858, 0.0
    %878 = vadd.xlane.f32.xlu0 %v877
    %v879 = vpop.xlane.xlu0 %878
    %v880 = vsel %vm424, %v860, 0.0
    %881 = vadd.xlane.f32.xlu0 %v880
    %v882 = vpop.xlane.xlu0 %881
    %v883 = vsel %vm424, %v862, 0.0
    %884 = vadd.xlane.f32.xlu0 %v883
    %v885 = vpop.xlane.xlu0 %884
    %v886 = vsel %vm424, %v864, 0.0
    %887 = vadd.xlane.f32.xlu0 %v886
    %v888 = vpop.xlane.xlu0 %887
    %v889 = vrcp.pop %v867
    %v890 = vrcp.pop %v870
    %v891 = vrcp.pop %v873
    %v892 = vrcp.pop %v876
    %v893 = vrcp.pop %v879
    %v894 = vrcp.pop %v882
    %v895 = vrcp.pop %v885
    %v896 = vrcp.pop %v888
    %v897 = vmul.f32 %v850, %v889
    %v898 = vmul.f32 %v852, %v890
    %v899 = vmul.f32 %v854, %v891
    %v900 = vmul.f32 %v856, %v892
    %v901 = vmul.f32 %v858, %v893
    %v902 = vmul.f32 %v860, %v894
    %v903 = vmul.f32 %v862, %v895
    %v904 = vmul.f32 %v864, %v896
    %v905 = vpack.c.bf16 %v897, %v897
    %v906 = vpack.c.bf16 %v898, %v898
    %v907 = vpack.c.bf16 %v899, %v899
    %v908 = vpack.c.bf16 %v900, %v900
    %v909 = vpack.c.bf16 %v901, %v901
    %v910 = vpack.c.bf16 %v902, %v902
    %v911 = vpack.c.bf16 %v903, %v903
    %v912 = vpack.c.bf16 %v904, %v904
    %v914 = vunpack.c.l.b16 %v274
    %v915 = vpack.c.b16 %v914, %v914
    %916 = vrot.lane.b32.xlu0 %v915, 112
    %v917 = vpop.permute.xlu0 %916
    %v920 = vunpack.c.l.b16 %v905
    %v921 = vunpack.c.l.b16 %v906
    %v922 = vpack.c.b16 %v921, %v920
    %v924 = vsel %vm424, %v917, 0
    %v927 = vsel %vm424, %v922, 0
    %929 = vmatpush.bf16.xpose.msra.mxu0 0
    %930 = vmatpush.bf16.xpose.msra.mxu0 0
    %931 = vmatpush.bf16.xpose.msra.mxu0 0
    %932 = vmatpush.bf16.xpose.msra.mxu0 0
    %933 = vmatpush.bf16.xpose.msra.mxu0 0
    %934 = vmatpush.bf16.xpose.msra.mxu0 0
    %935 = vmatpush.bf16.xpose.msra.mxu0 0
    %936 = vmatpush.bf16.xpose.msra.mxu0 %v927
    %937 = vmatmul.bf16.gmra.mxu0 %v924
    %v938 = vpop.f32.mrf.mxu0
    %v939 = vadd.f32 0.0, %v938
    %v940 = vpop.f32.mrf.mxu0
    %941 = vdwg.mxu0
    %v943 = vunpack.c.l.b16 %v275
    %v944 = vpack.c.b16 %v943, %v943
    %945 = vrot.lane.b32.xlu0 %v944, 112
    %v946 = vpop.permute.xlu0 %945
    %v949 = vunpack.c.l.b16 %v907
    %v950 = vunpack.c.l.b16 %v908
    %v951 = vpack.c.b16 %v950, %v949
    %v953 = vsel %vm424, %v946, 0
    %v956 = vsel %vm424, %v951, 0
    %958 = vmatpush.bf16.xpose.msra.mxu0 0
    %959 = vmatpush.bf16.xpose.msra.mxu0 0
    %960 = vmatpush.bf16.xpose.msra.mxu0 0
    %961 = vmatpush.bf16.xpose.msra.mxu0 0
    %962 = vmatpush.bf16.xpose.msra.mxu0 0
    %963 = vmatpush.bf16.xpose.msra.mxu0 0
    %964 = vmatpush.bf16.xpose.msra.mxu0 0
    %965 = vmatpush.bf16.xpose.msra.mxu0 %v956
    %966 = vmatmul.bf16.gmra.mxu0 %v953
    %v967 = vpop.f32.mrf.mxu0
    %v968 = vadd.f32 0.0, %v967
    %v969 = vpop.f32.mrf.mxu0
    %970 = vdwg.mxu0
    %v972 = vunpack.c.l.b16 %v276
    %v973 = vpack.c.b16 %v972, %v972
    %974 = vrot.lane.b32.xlu0 %v973, 112
    %v975 = vpop.permute.xlu0 %974
    %v978 = vunpack.c.l.b16 %v909
    %v979 = vunpack.c.l.b16 %v910
    %v980 = vpack.c.b16 %v979, %v978
    %v982 = vsel %vm424, %v975, 0
    %v985 = vsel %vm424, %v980, 0
    %987 = vmatpush.bf16.xpose.msra.mxu0 0
    %988 = vmatpush.bf16.xpose.msra.mxu0 0
    %989 = vmatpush.bf16.xpose.msra.mxu0 0
    %990 = vmatpush.bf16.xpose.msra.mxu0 0
    %991 = vmatpush.bf16.xpose.msra.mxu0 0
    %992 = vmatpush.bf16.xpose.msra.mxu0 0
    %993 = vmatpush.bf16.xpose.msra.mxu0 0
    %994 = vmatpush.bf16.xpose.msra.mxu0 %v985
    %995 = vmatmul.bf16.gmra.mxu0 %v982
    %v996 = vpop.f32.mrf.mxu0
    %v997 = vadd.f32 0.0, %v996
    %v998 = vpop.f32.mrf.mxu0
    %999 = vdwg.mxu0
    %v1001 = vunpack.c.l.b16 %v277
    %v1002 = vpack.c.b16 %v1001, %v1001
    %1003 = vrot.lane.b32.xlu0 %v1002, 112
    %v1004 = vpop.permute.xlu0 %1003
    %v1007 = vunpack.c.l.b16 %v911
    %v1008 = vunpack.c.l.b16 %v912
    %v1009 = vpack.c.b16 %v1008, %v1007
    %v1011 = vsel %vm424, %v1004, 0
    %v1014 = vsel %vm424, %v1009, 0
    %1016 = vmatpush.bf16.xpose.msra.mxu0 0
    %1017 = vmatpush.bf16.xpose.msra.mxu0 0
    %1018 = vmatpush.bf16.xpose.msra.mxu0 0
    %1019 = vmatpush.bf16.xpose.msra.mxu0 0
    %1020 = vmatpush.bf16.xpose.msra.mxu0 0
    %1021 = vmatpush.bf16.xpose.msra.mxu0 0
    %1022 = vmatpush.bf16.xpose.msra.mxu0 0
    %1023 = vmatpush.bf16.xpose.msra.mxu0 %v1014
    %1024 = vmatmul.bf16.gmra.mxu0 %v1011
    %v1025 = vpop.f32.mrf.mxu0
    %v1026 = vadd.f32 0.0, %v1025
    %v1027 = vpop.f32.mrf.mxu0
    %1028 = vdwg.mxu0
    %v1030 = vrot.slane %v968, 6
    %v1033 = vrot.slane %v997, 4
    %v1036 = vrot.slane %v1026, 2
    %v1038 = vsel %vm169, %v939, %v1030
    %v1039 = vsel %vm80, %v1038, %v1033
    %v1040 = vsel %vm94, %v1039, %v1036
    %1042 = vrot.lane.b32.xlu0 %v1040, 16
    %v1043 = vpop.permute.xlu0 %1042
    %v1045 = vsel %vm424, %v628, %v1043
    %v1046 = vpack.c.bf16 %v1045, %v1045
    %v1047 = vld [vmem:[%s9] sm:$0xf]
    %v1048 = vld [vmem:[%s10] sm:$0xff]
    %1050 = vset.pattern.permute.xlu0 0
    %1051 = vperm.xlu0 %1050, %v1048
    %v1052 = vpop.permute.xlu0 %1051
    %v1055 = vsel %vm216, %v1047, 0
    %v1058 = vsel %vm80, %v1046, 0
    %1060 = vmatpush.bf16.msra.mxu0 0
    %1061 = vmatpush.bf16.msra.mxu0 0
    %1062 = vmatpush.bf16.msra.mxu0 0
    %1063 = vmatpush.bf16.msra.mxu0 0
    %1064 = vmatpush.bf16.msra.mxu0 0
    %1065 = vmatpush.bf16.msra.mxu0 0
    %1066 = vmatpush.bf16.msra.mxu0 0
    %1067 = vmatpush.bf16.msra.mxu0 %v1058
    %1068 = vmatmul.bf16.gmra.mxu0 %v1055
    %v1069 = vpop.f32.mrf.mxu0
    %v1070 = vadd.f32 %v1052, %v1069
    %v1071 = vpop.f32.mrf.mxu0
    %1072 = vdwg.mxu0
    %v1073 = vadd.f32 %v1070, %v183
    %v1074 = vmax.f32 %v1073, 0.0
    %vm1075 = vcmask 261120
    %1076 = vst.msk [vmem:[#allocation2] sm:$0xff] %vm1075, %v1074
    // Predicated region
    $region46: #{tpu_custom_call.1} parent=1 // pred_check
      _
    $region47: #{tpu_custom_call.1} parent=1 // pred_check_branch
      %1078 = sbr.rel (0) target = $region49
    $region48: #{tpu_custom_call.1} parent=1 // pred_region
      %1080 = vsyncadd [#allocation3], 0
      %s1082 = sshll.u32 [#allocation2], 4
      %s1083 = int_to_ptr.vmem [resolvable:$true] %s1082
      %s1084 = sshll.u32 %s11, 4
      %s1085 = int_to_ptr.hbm [resolvable:$true] %s1084
      %1087 = dma.vmem_to_hbm [thread:$0]  %s1083, 128, %s1085, [#allocation3]
    $region49: #{tpu_custom_call.1} parent=1 // pred_fallthru
      _
    // Predicated region
    $region50: #{tpu_custom_call.1} parent=1 // pred_check
      _
    $region51: #{tpu_custom_call.1} parent=1 // pred_check_branch
      %1089 = sbr.rel (0) target = $region53
    $region52: #{tpu_custom_call.1} parent=1 // pred_region
      %1091 = dma.done [#allocation3], 128
    $region53: #{tpu_custom_call.1} parent=1 // pred_fallthru
      _
    %1092 = vsyncpa [#allocation3], 1

</llo_original>
